<compile_context>
chip_gen: v7x
topology: tpu7x:2x2x1
jax: 0.10.0
libtpu: 0.0.40
codegen_flags: <defaults>
</compile_context>

<pallas_src>
import functools

import jax
import jax.numpy as jnp
from jax.experimental import pallas as pl
from jax.experimental.pallas import tpu as pltpu


# ----------------------------- kernel ---------------------------------------


def _relpos_kernel(q_ref, ww_ref, wh_ref, ew_ref, eh_ref, out_ref,
                   *, bb, X, Y, D, r):
    K = r * r
    f32 = jnp.float32
    q4 = q_ref[...]                                   # (bb, X, Y, D) bf16

    # --- width term: a single MXU matmul against the block-diagonal table
    #     ww[(y',d), (y,j)] = (y'==y) * rel_width[r-1 + j - y, d]
    # The rel_to_abs shift is baked into ww, so no post-matmul lane slices,
    # rolls or concats are needed.
    q2 = q4.reshape(bb * X, Y * D)                    # tiny (y,d)->lanes relayout
    w_abs = jnp.dot(q2, ww_ref[...],
                    preferred_element_type=f32)       # (bb*X, Y*r)

    # --- height term: per-x shifted tables wh[x] = rel_height[r-1+p-x, :].T.
    # x is a leading (untiled) dim, so the static loop only issues X tiny
    # matmuls on the otherwise idle MXU (no sublane/lane data movement).
    h_parts = []
    for x in range(X):
        qx = q4[:, x].reshape(bb * Y, D)              # free reshape
        hx = jnp.dot(qx, wh_ref[x],
                     preferred_element_type=f32)      # (bb*Y, r)
        h_parts.append(hx.reshape(bb, Y, r))
    h_abs = jnp.stack(h_parts, axis=1)                # (bb, X, Y, r), leading-dim stack
    h_abs = h_abs.reshape(bb * X, Y * r)              # tiny (y,p)->lanes relayout

    # --- broadcast-add expansion on the MXU with constant 0/1 matrices:
    #     out[.., y*K + p*r + q] = h_abs[.., y*r + p] + w_abs[.., y*r + q]
    # This replaces the old sub-128-lane broadcasts and yields the lane-dense
    # (bb, X, Y*r*r) store layout directly.  Add in f32, cast only at the store.
    out = jnp.dot(h_abs.astype(jnp.bfloat16), eh_ref[...],
                  preferred_element_type=f32)
    out = out + jnp.dot(w_abs.astype(jnp.bfloat16), ew_ref[...],
                        preferred_element_type=f32)
    out_ref[...] = out.reshape(bb, X, Y * K).astype(out_ref.dtype)


# ----------------------------- wrapper ---------------------------------------


def make_relpos_tables(rel_width, rel_height, block_size, seq_len,
                       dtype=jnp.bfloat16):
    """Precompute the fused shift+expansion tables (hoisted out of the call path)."""
    m, D = rel_width.shape
    r = (m + 1) // 2
    assert rel_height.shape == (m, D)
    X = block_size
    Y = seq_len // block_size
    assert X * Y == seq_len
    # TODO(synk): torch rel_to_abs wrap-around corner (block or seq/block > rel_size)
    # is not supported; standard module usage satisfies the assert below.
    assert X <= r and Y <= r
    K = r * r

    # Width: block-diagonal (Y*D, Y*r) table with the rel_to_abs shift baked in:
    #   ww[(y2, d), (y, j)] = (y2 == y) * rel_width[r-1 + j - y, d]
    ww = jnp.zeros((Y, D, Y, r), dtype)
    for y in range(Y):
        ww = ww.at[y, :, y, :].set(
            rel_width[r - 1 - y: 2 * r - 1 - y].T.astype(dtype))
    ww = ww.reshape(Y * D, Y * r)

    # Height: per-x shifted (D, r) tables: wh[x, d, p] = rel_height[r-1 + p - x, d]
    wh = jnp.stack(
        [rel_height[r - 1 - x: 2 * r - 1 - x].T.astype(dtype) for x in range(X)],
        axis=0)                                                   # (X, D, r)

    # Expansion matrices (broadcast-add done on the MXU):
    #   ew[(y2, j ), y*K + p*r + q] = (y2 == y) * (j  == q)
    #   eh[(y2, p2), y*K + p*r + q] = (y2 == y) * (p2 == p)
    eye_r = jnp.eye(r, dtype=dtype)
    ew = jnp.zeros((Y, r, Y, r, r), dtype)
    eh = jnp.zeros((Y, r, Y, r, r), dtype)
    for y in range(Y):
        ew = ew.at[y, :, y, :, :].set(jnp.broadcast_to(eye_r[:, None, :], (r, r, r)))
        eh = eh.at[y, :, y, :, :].set(jnp.broadcast_to(eye_r[:, :, None], (r, r, r)))
    ew = ew.reshape(Y * r, Y * K)
    eh = eh.reshape(Y * r, Y * K)
    return ww, wh, ew, eh


def rel_pos_emb(q, rel_width, rel_height, block_size, *, tables=None,
                out_dtype=jnp.bfloat16, compute_dtype=jnp.bfloat16,
                batch_block=None, vmem_block_budget_bytes=8 * 1024 * 1024):
    """RelPosEmb forward. Returns (B, N, rel_size**2).

    out_dtype defaults to bf16 per the perf review (output dominates HBM
    traffic); pass out_dtype=q.dtype for exact dtype parity with the module.
    """
    B, N, D = q.shape
    m = rel_width.shape[0]
    r = (m + 1) // 2
    X = block_size
    Y = N // X
    K = r * r
    assert X * Y == N

    if tables is None:
        tables = make_relpos_tables(rel_width, rel_height, block_size, N,
                                    dtype=compute_dtype)
    ww, wh, ew, eh = tables

    # bf16 q halves the kernel's input HBM read (matmul accumulates in f32).
    q4 = q.reshape(B, X, Y, D).astype(compute_dtype)

    # --- batch-block sizing with honest VMEM accounting (review item):
    # 2x double-buffered in/out blocks + in-kernel f32 temporaries.
    in_bytes = N * D * jnp.dtype(compute_dtype).itemsize
    out_bytes = N * K * jnp.dtype(out_dtype).itemsize
    f32_tmp = 3 * (N * K * 4) + 3 * (N * r * 4) + N * D * 4
    per_batch = 2 * in_bytes + 2 * out_bytes + f32_tmp
    table_bytes = 2 * sum(int(t.size) * t.dtype.itemsize for t in (ww, wh, ew, eh))

    if batch_block is None:
        bb = max(1, (vmem_block_budget_bytes - table_bytes) // per_batch)
        # v7x has 2 TensorCores: keep >= 2 "parallel" grid steps so the batch
        # axis can shard across them (single-TC v5e/v6e are unaffected).
        bb = min(bb, max(1, pl.cdiv(B, 2)))
    else:
        bb = batch_block
    bb = max(1, min(bb, B))
    while B % bb:
        bb -= 1
    grid = (B // bb,)

    vmem_limit = int(min(32 * 1024 * 1024,
                         max(16 * 1024 * 1024,
                             2 * (bb * per_batch + table_bytes))))

    kernel = functools.partial(_relpos_kernel, bb=bb, X=X, Y=Y, D=D, r=r)

    out3 = pl.pallas_call(
        kernel,
        out_shape=jax.ShapeDtypeStruct((B, X, Y * K), out_dtype),
        grid_spec=pltpu.PrefetchScalarGridSpec(
            num_scalar_prefetch=0,
            grid=grid,
            in_specs=[
                pl.BlockSpec((bb, X, Y, D), lambda b: (b, 0, 0, 0)),
                pl.BlockSpec(ww.shape, lambda b: (0, 0)),
                pl.BlockSpec(wh.shape, lambda b: (0, 0, 0)),
                pl.BlockSpec(ew.shape, lambda b: (0, 0)),
                pl.BlockSpec(eh.shape, lambda b: (0, 0)),
            ],
            out_specs=pl.BlockSpec((bb, X, Y * K), lambda b: (b, 0, 0)),
        ),
        compiler_params=pltpu.CompilerParams(
            dimension_semantics=("parallel",),
            vmem_limit_bytes=vmem_limit),
    )(q4, ww, wh, ew, eh)
    # (B, X, Y*r*r) -> (B, N, r*r) is a free contiguous view.
    return out3.reshape(B, N, K)


# ---------------- pure-JAX reference (literal port of the torch module) ------


def _rel_to_abs_ref(x):
    b, l, m = x.shape
    r = (m + 1) // 2
    x = jnp.concatenate([x, jnp.zeros((b, l, 1), x.dtype)], axis=2)
    flat = x.reshape(b, l * (m + 1))
    flat = jnp.concatenate([flat, jnp.zeros((b, m - l), x.dtype)], axis=1)
    final = flat.reshape(b, l + 1, m)
    return final[:, :l, m - r:]


def _relative_logits_1d_ref(q, rel_k):
    b, h, w, _ = q.shape
    r = (rel_k.shape[0] + 1) // 2
    logits = jnp.einsum('bxyd,rd->bxyr', q, rel_k)
    logits = logits.reshape(b * h, w, -1)
    logits = _rel_to_abs_ref(logits)
    logits = logits.reshape(b, h, w, r)
    return jnp.broadcast_to(logits[:, :, None, :, :], (b, h, r, w, r))


def rel_pos_emb_ref(q, rel_width, rel_height, block_size):
    B, N, D = q.shape
    X = block_size
    Y = N // X
    r = (rel_width.shape[0] + 1) // 2
    q4 = q.reshape(B, X, Y, D)
    rw = _relative_logits_1d_ref(q4, rel_width)                    # (B,X,r,Y,r)
    rw = rw.transpose(0, 1, 3, 2, 4).reshape(B, X * Y, r * r)      # b (x y) (i j)
    qt = q4.transpose(0, 2, 1, 3)                                  # (B,Y,X,D)
    rh = _relative_logits_1d_ref(qt, rel_height)                   # (B,Y,r,X,r)
    rh = rh.transpose(0, 3, 1, 4, 2).reshape(B, X * Y, r * r)      # b (y x) (j i)
    return rw + rh


if __name__ == "__main__":
    B, block_size, rel_size, dim_head = 2, 8, 8, 32
    N = block_size * rel_size          # q is 'b (x y) c' with x = block, y = rel
    scale = dim_head ** (-0.5)

    key = jax.random.PRNGKey(0)
    kq, kh, kw = jax.random.split(key, 3)
    q = jax.random.normal(kq, (B, N, dim_head), jnp.float32)
    rel_height = jax.random.normal(kh, (rel_size * 2 - 1, dim_head),
                                   jnp.float32) * scale
    rel_width = jax.random.normal(kw, (rel_size * 2 - 1, dim_head),
                                  jnp.float32) * scale

    # Hoisted table construction (review item: build once per module, reuse).
    tables = make_relpos_tables(rel_width, rel_height, block_size, N)

    out = jax.block_until_ready(
        rel_pos_emb(q, rel_width, rel_height, block_size, tables=tables))
    ref = rel_pos_emb_ref(q, rel_width, rel_height, block_size)

    assert out.shape == (B, N, rel_size * rel_size)
    # bf16 MXU operands + bf16 output (per the perf review) -> loosened tolerance
    # versus the f32 reference.
    out_f32 = out.astype(jnp.float32)
    err = float(jnp.max(jnp.abs(out_f32 - ref)))
    assert jnp.allclose(out_f32, ref, atol=7.5e-2, rtol=7.5e-2), err
    print("KERNEL_OK")
</pallas_src>

<mosaic_0001>
module attributes {stable_mosaic.version = 11 : i64} {
  func.func @_relpos_kernel(%arg0: i32, %arg1: memref<1x8x8x32xbf16, #tpu.memory_space<vmem>>, %arg2: memref<256x64xbf16, #tpu.memory_space<vmem>>, %arg3: memref<8x32x8xbf16, #tpu.memory_space<vmem>>, %arg4: memref<64x512xbf16, #tpu.memory_space<vmem>>, %arg5: memref<64x512xbf16, #tpu.memory_space<vmem>>, %arg6: memref<1x8x512xbf16, #tpu.memory_space<vmem>>) attributes {dimension_semantics = [#tpu.dimension_semantics<parallel>], iteration_bounds = array<i64: 2>, scalar_prefetch = 0 : i64, scratch_operands = 0 : i64, tpu.core_type = #tpu.core_type<tc>, window_params = [{transform_indices = @transform_0, window_bounds = array<i64: 1, 8, 8, 32>}, {pipeline_mode = #tpu.pipeline_mode<synchronous>, transform_indices = @transform_1, window_bounds = array<i64: 256, 64>}, {pipeline_mode = #tpu.pipeline_mode<synchronous>, transform_indices = @transform_2, window_bounds = array<i64: 8, 32, 8>}, {pipeline_mode = #tpu.pipeline_mode<synchronous>, transform_indices = @transform_3, window_bounds = array<i64: 64, 512>}, {pipeline_mode = #tpu.pipeline_mode<synchronous>, transform_indices = @transform_4, window_bounds = array<i64: 64, 512>}, {transform_indices = @transform_5, window_bounds = array<i64: 1, 8, 512>}]} {
    %c0 = arith.constant 0 : index
    %c0_0 = arith.constant 0 : index
    %c0_1 = arith.constant 0 : index
    %c0_2 = arith.constant 0 : index
    %0 = vector.load %arg1[%c0, %c0_0, %c0_1, %c0_2] : memref<1x8x8x32xbf16, #tpu.memory_space<vmem>>, vector<1x8x8x32xbf16>
    %1 = vector.shape_cast %0 : vector<1x8x8x32xbf16> to vector<8x256xbf16>
    %c0_3 = arith.constant 0 : index
    %c0_4 = arith.constant 0 : index
    %2 = vector.load %arg2[%c0_3, %c0_4] : memref<256x64xbf16, #tpu.memory_space<vmem>>, vector<256x64xbf16>
    %cst = arith.constant dense<0.000000e+00> : vector<8x64xf32>
    %3 = tpu.matmul %1, %2, %cst {dimension_numbers = #tpu.dot_dimension_numbers<[1], [0], [0], [1], [0, 0, 1, 1], [], []>} : vector<8x256xbf16>, vector<256x64xbf16>, vector<8x64xf32> -> vector<8x64xf32>
    %4 = vector.extract_strided_slice %0 {offsets = [0, 0, 0, 0], sizes = [1, 1, 8, 32], strides = [1, 1, 1, 1]} : vector<1x8x8x32xbf16> to vector<1x1x8x32xbf16>
    %5 = vector.shape_cast %4 : vector<1x1x8x32xbf16> to vector<1x8x32xbf16>
    %6 = vector.shape_cast %5 : vector<1x8x32xbf16> to vector<8x32xbf16>
    %c0_5 = arith.constant 0 : index
    %c0_6 = arith.constant 0 : index
    %c0_7 = arith.constant 0 : index
    %7 = vector.load %arg3[%c0_5, %c0_6, %c0_7] : memref<8x32x8xbf16, #tpu.memory_space<vmem>>, vector<1x32x8xbf16>
    %8 = vector.shape_cast %7 : vector<1x32x8xbf16> to vector<32x8xbf16>
    %cst_8 = arith.constant dense<0.000000e+00> : vector<8x8xf32>
    %9 = tpu.matmul %6, %8, %cst_8 {dimension_numbers = #tpu.dot_dimension_numbers<[1], [0], [0], [1], [0, 0, 1, 1], [], []>} : vector<8x32xbf16>, vector<32x8xbf16>, vector<8x8xf32> -> vector<8x8xf32>
    %10 = vector.shape_cast %9 : vector<8x8xf32> to vector<1x8x8xf32>
    %11 = vector.extract_strided_slice %0 {offsets = [0, 1, 0, 0], sizes = [1, 1, 8, 32], strides = [1, 1, 1, 1]} : vector<1x8x8x32xbf16> to vector<1x1x8x32xbf16>
    %12 = vector.shape_cast %11 : vector<1x1x8x32xbf16> to vector<1x8x32xbf16>
    %13 = vector.shape_cast %12 : vector<1x8x32xbf16> to vector<8x32xbf16>
    %c1 = arith.constant 1 : index
    %c0_9 = arith.constant 0 : index
    %c0_10 = arith.constant 0 : index
    %14 = vector.load %arg3[%c1, %c0_9, %c0_10] : memref<8x32x8xbf16, #tpu.memory_space<vmem>>, vector<1x32x8xbf16>
    %15 = vector.shape_cast %14 : vector<1x32x8xbf16> to vector<32x8xbf16>
    %cst_11 = arith.constant dense<0.000000e+00> : vector<8x8xf32>
    %16 = tpu.matmul %13, %15, %cst_11 {dimension_numbers = #tpu.dot_dimension_numbers<[1], [0], [0], [1], [0, 0, 1, 1], [], []>} : vector<8x32xbf16>, vector<32x8xbf16>, vector<8x8xf32> -> vector<8x8xf32>
    %17 = vector.shape_cast %16 : vector<8x8xf32> to vector<1x8x8xf32>
    %18 = vector.extract_strided_slice %0 {offsets = [0, 2, 0, 0], sizes = [1, 1, 8, 32], strides = [1, 1, 1, 1]} : vector<1x8x8x32xbf16> to vector<1x1x8x32xbf16>
    %19 = vector.shape_cast %18 : vector<1x1x8x32xbf16> to vector<1x8x32xbf16>
    %20 = vector.shape_cast %19 : vector<1x8x32xbf16> to vector<8x32xbf16>
    %c2 = arith.constant 2 : index
    %c0_12 = arith.constant 0 : index
    %c0_13 = arith.constant 0 : index
    %21 = vector.load %arg3[%c2, %c0_12, %c0_13] : memref<8x32x8xbf16, #tpu.memory_space<vmem>>, vector<1x32x8xbf16>
    %22 = vector.shape_cast %21 : vector<1x32x8xbf16> to vector<32x8xbf16>
    %cst_14 = arith.constant dense<0.000000e+00> : vector<8x8xf32>
    %23 = tpu.matmul %20, %22, %cst_14 {dimension_numbers = #tpu.dot_dimension_numbers<[1], [0], [0], [1], [0, 0, 1, 1], [], []>} : vector<8x32xbf16>, vector<32x8xbf16>, vector<8x8xf32> -> vector<8x8xf32>
    %24 = vector.shape_cast %23 : vector<8x8xf32> to vector<1x8x8xf32>
    %25 = vector.extract_strided_slice %0 {offsets = [0, 3, 0, 0], sizes = [1, 1, 8, 32], strides = [1, 1, 1, 1]} : vector<1x8x8x32xbf16> to vector<1x1x8x32xbf16>
    %26 = vector.shape_cast %25 : vector<1x1x8x32xbf16> to vector<1x8x32xbf16>
    %27 = vector.shape_cast %26 : vector<1x8x32xbf16> to vector<8x32xbf16>
    %c3 = arith.constant 3 : index
    %c0_15 = arith.constant 0 : index
    %c0_16 = arith.constant 0 : index
    %28 = vector.load %arg3[%c3, %c0_15, %c0_16] : memref<8x32x8xbf16, #tpu.memory_space<vmem>>, vector<1x32x8xbf16>
    %29 = vector.shape_cast %28 : vector<1x32x8xbf16> to vector<32x8xbf16>
    %cst_17 = arith.constant dense<0.000000e+00> : vector<8x8xf32>
    %30 = tpu.matmul %27, %29, %cst_17 {dimension_numbers = #tpu.dot_dimension_numbers<[1], [0], [0], [1], [0, 0, 1, 1], [], []>} : vector<8x32xbf16>, vector<32x8xbf16>, vector<8x8xf32> -> vector<8x8xf32>
    %31 = vector.shape_cast %30 : vector<8x8xf32> to vector<1x8x8xf32>
    %32 = vector.extract_strided_slice %0 {offsets = [0, 4, 0, 0], sizes = [1, 1, 8, 32], strides = [1, 1, 1, 1]} : vector<1x8x8x32xbf16> to vector<1x1x8x32xbf16>
    %33 = vector.shape_cast %32 : vector<1x1x8x32xbf16> to vector<1x8x32xbf16>
    %34 = vector.shape_cast %33 : vector<1x8x32xbf16> to vector<8x32xbf16>
    %c4 = arith.constant 4 : index
    %c0_18 = arith.constant 0 : index
    %c0_19 = arith.constant 0 : index
    %35 = vector.load %arg3[%c4, %c0_18, %c0_19] : memref<8x32x8xbf16, #tpu.memory_space<vmem>>, vector<1x32x8xbf16>
    %36 = vector.shape_cast %35 : vector<1x32x8xbf16> to vector<32x8xbf16>
    %cst_20 = arith.constant dense<0.000000e+00> : vector<8x8xf32>
    %37 = tpu.matmul %34, %36, %cst_20 {dimension_numbers = #tpu.dot_dimension_numbers<[1], [0], [0], [1], [0, 0, 1, 1], [], []>} : vector<8x32xbf16>, vector<32x8xbf16>, vector<8x8xf32> -> vector<8x8xf32>
    %38 = vector.shape_cast %37 : vector<8x8xf32> to vector<1x8x8xf32>
    %39 = vector.extract_strided_slice %0 {offsets = [0, 5, 0, 0], sizes = [1, 1, 8, 32], strides = [1, 1, 1, 1]} : vector<1x8x8x32xbf16> to vector<1x1x8x32xbf16>
    %40 = vector.shape_cast %39 : vector<1x1x8x32xbf16> to vector<1x8x32xbf16>
    %41 = vector.shape_cast %40 : vector<1x8x32xbf16> to vector<8x32xbf16>
    %c5 = arith.constant 5 : index
    %c0_21 = arith.constant 0 : index
    %c0_22 = arith.constant 0 : index
    %42 = vector.load %arg3[%c5, %c0_21, %c0_22] : memref<8x32x8xbf16, #tpu.memory_space<vmem>>, vector<1x32x8xbf16>
    %43 = vector.shape_cast %42 : vector<1x32x8xbf16> to vector<32x8xbf16>
    %cst_23 = arith.constant dense<0.000000e+00> : vector<8x8xf32>
    %44 = tpu.matmul %41, %43, %cst_23 {dimension_numbers = #tpu.dot_dimension_numbers<[1], [0], [0], [1], [0, 0, 1, 1], [], []>} : vector<8x32xbf16>, vector<32x8xbf16>, vector<8x8xf32> -> vector<8x8xf32>
    %45 = vector.shape_cast %44 : vector<8x8xf32> to vector<1x8x8xf32>
    %46 = vector.extract_strided_slice %0 {offsets = [0, 6, 0, 0], sizes = [1, 1, 8, 32], strides = [1, 1, 1, 1]} : vector<1x8x8x32xbf16> to vector<1x1x8x32xbf16>
    %47 = vector.shape_cast %46 : vector<1x1x8x32xbf16> to vector<1x8x32xbf16>
    %48 = vector.shape_cast %47 : vector<1x8x32xbf16> to vector<8x32xbf16>
    %c6 = arith.constant 6 : index
    %c0_24 = arith.constant 0 : index
    %c0_25 = arith.constant 0 : index
    %49 = vector.load %arg3[%c6, %c0_24, %c0_25] : memref<8x32x8xbf16, #tpu.memory_space<vmem>>, vector<1x32x8xbf16>
    %50 = vector.shape_cast %49 : vector<1x32x8xbf16> to vector<32x8xbf16>
    %cst_26 = arith.constant dense<0.000000e+00> : vector<8x8xf32>
    %51 = tpu.matmul %48, %50, %cst_26 {dimension_numbers = #tpu.dot_dimension_numbers<[1], [0], [0], [1], [0, 0, 1, 1], [], []>} : vector<8x32xbf16>, vector<32x8xbf16>, vector<8x8xf32> -> vector<8x8xf32>
    %52 = vector.shape_cast %51 : vector<8x8xf32> to vector<1x8x8xf32>
    %53 = vector.extract_strided_slice %0 {offsets = [0, 7, 0, 0], sizes = [1, 1, 8, 32], strides = [1, 1, 1, 1]} : vector<1x8x8x32xbf16> to vector<1x1x8x32xbf16>
    %54 = vector.shape_cast %53 : vector<1x1x8x32xbf16> to vector<1x8x32xbf16>
    %55 = vector.shape_cast %54 : vector<1x8x32xbf16> to vector<8x32xbf16>
    %c7 = arith.constant 7 : index
    %c0_27 = arith.constant 0 : index
    %c0_28 = arith.constant 0 : index
    %56 = vector.load %arg3[%c7, %c0_27, %c0_28] : memref<8x32x8xbf16, #tpu.memory_space<vmem>>, vector<1x32x8xbf16>
    %57 = vector.shape_cast %56 : vector<1x32x8xbf16> to vector<32x8xbf16>
    %cst_29 = arith.constant dense<0.000000e+00> : vector<8x8xf32>
    %58 = tpu.matmul %55, %57, %cst_29 {dimension_numbers = #tpu.dot_dimension_numbers<[1], [0], [0], [1], [0, 0, 1, 1], [], []>} : vector<8x32xbf16>, vector<32x8xbf16>, vector<8x8xf32> -> vector<8x8xf32>
    %59 = vector.shape_cast %58 : vector<8x8xf32> to vector<1x8x8xf32>
    %60 = vector.shape_cast %10 : vector<1x8x8xf32> to vector<1x1x8x8xf32>
    %61 = vector.shape_cast %17 : vector<1x8x8xf32> to vector<1x1x8x8xf32>
    %62 = vector.shape_cast %24 : vector<1x8x8xf32> to vector<1x1x8x8xf32>
    %63 = vector.shape_cast %31 : vector<1x8x8xf32> to vector<1x1x8x8xf32>
    %64 = vector.shape_cast %38 : vector<1x8x8xf32> to vector<1x1x8x8xf32>
    %65 = vector.shape_cast %45 : vector<1x8x8xf32> to vector<1x1x8x8xf32>
    %66 = vector.shape_cast %52 : vector<1x8x8xf32> to vector<1x1x8x8xf32>
    %67 = vector.shape_cast %59 : vector<1x8x8xf32> to vector<1x1x8x8xf32>
    %68 = tpu.concatenate %60, %61, %62, %63, %64, %65, %66, %67 in 1 : vector<1x1x8x8xf32>, vector<1x1x8x8xf32>, vector<1x1x8x8xf32>, vector<1x1x8x8xf32>, vector<1x1x8x8xf32>, vector<1x1x8x8xf32>, vector<1x1x8x8xf32>, vector<1x1x8x8xf32> -> vector<1x8x8x8xf32>
    %69 = vector.shape_cast %68 : vector<1x8x8x8xf32> to vector<8x64xf32>
    %70 = arith.truncf %69 : vector<8x64xf32> to vector<8x64xbf16>
    %c0_30 = arith.constant 0 : index
    %c0_31 = arith.constant 0 : index
    %71 = vector.load %arg5[%c0_30, %c0_31] : memref<64x512xbf16, #tpu.memory_space<vmem>>, vector<64x512xbf16>
    %cst_32 = arith.constant dense<0.000000e+00> : vector<8x512xf32>
    %72 = tpu.matmul %70, %71, %cst_32 {dimension_numbers = #tpu.dot_dimension_numbers<[1], [0], [0], [1], [0, 0, 1, 1], [], []>} : vector<8x64xbf16>, vector<64x512xbf16>, vector<8x512xf32> -> vector<8x512xf32>
    %73 = arith.truncf %3 : vector<8x64xf32> to vector<8x64xbf16>
    %c0_33 = arith.constant 0 : index
    %c0_34 = arith.constant 0 : index
    %74 = vector.load %arg4[%c0_33, %c0_34] : memref<64x512xbf16, #tpu.memory_space<vmem>>, vector<64x512xbf16>
    %cst_35 = arith.constant dense<0.000000e+00> : vector<8x512xf32>
    %75 = tpu.matmul %73, %74, %cst_35 {dimension_numbers = #tpu.dot_dimension_numbers<[1], [0], [0], [1], [0, 0, 1, 1], [], []>} : vector<8x64xbf16>, vector<64x512xbf16>, vector<8x512xf32> -> vector<8x512xf32>
    %76 = arith.addf %72, %75 : vector<8x512xf32>
    %77 = vector.shape_cast %76 : vector<8x512xf32> to vector<1x8x512xf32>
    %78 = arith.truncf %77 : vector<1x8x512xf32> to vector<1x8x512xbf16>
    %c0_36 = arith.constant 0 : index
    %c0_37 = arith.constant 0 : index
    %c0_38 = arith.constant 0 : index
    %79 = vector.load %arg6[%c0_36, %c0_37, %c0_38] : memref<1x8x512xbf16, #tpu.memory_space<vmem>>, vector<1x8x512xbf16>
    tpu.vector_store %arg6[%c0_36, %c0_37, %c0_38], %78 {strides = array<i32>} : memref<1x8x512xbf16, #tpu.memory_space<vmem>>, vector<1x8x512xbf16>,
    return
  }
  func.func @transform_0(%arg0: i32) -> (i32, i32, i32, i32) {
    %c0_i32 = arith.constant 0 : i32
    %c0_i32_0 = arith.constant 0 : i32
    %c0_i32_1 = arith.constant 0 : i32
    %c0_i32_2 = arith.constant 0 : i32
    return %arg0, %c0_i32, %c0_i32_0, %c0_i32_1 : i32, i32, i32, i32
  }
  func.func @transform_1(%arg0: i32) -> (i32, i32) {
    %c0_i32 = arith.constant 0 : i32
    %c0_i32_0 = arith.constant 0 : i32
    %c0_i32_1 = arith.constant 0 : i32
    return %c0_i32, %c0_i32_0 : i32, i32
  }
  func.func @transform_2(%arg0: i32) -> (i32, i32, i32) {
    %c0_i32 = arith.constant 0 : i32
    %c0_i32_0 = arith.constant 0 : i32
    %c0_i32_1 = arith.constant 0 : i32
    %c0_i32_2 = arith.constant 0 : i32
    return %c0_i32, %c0_i32_0, %c0_i32_1 : i32, i32, i32
  }
  func.func @transform_3(%arg0: i32) -> (i32, i32) {
    %c0_i32 = arith.constant 0 : i32
    %c0_i32_0 = arith.constant 0 : i32
    %c0_i32_1 = arith.constant 0 : i32
    return %c0_i32, %c0_i32_0 : i32, i32
  }
  func.func @transform_4(%arg0: i32) -> (i32, i32) {
    %c0_i32 = arith.constant 0 : i32
    %c0_i32_0 = arith.constant 0 : i32
    %c0_i32_1 = arith.constant 0 : i32
    return %c0_i32, %c0_i32_0 : i32, i32
  }
  func.func @transform_5(%arg0: i32) -> (i32, i32, i32) {
    %c0_i32 = arith.constant 0 : i32
    %c0_i32_0 = arith.constant 0 : i32
    %c0_i32_1 = arith.constant 0 : i32
    return %arg0, %c0_i32, %c0_i32_0 : i32, i32, i32
  }
}

</mosaic_0001>

<llo_original>
// kernel: tpu_custom_call.1
$region0: #{tpu_custom_call.1}
  #allocation0 [shape = 'u32[]', space=smem, size = 0x4, offset = 0x4, fixed_abs, tag = 'smem constant byte address 0x4 - core index']
  #allocation1 [shape = 'u32[144,128]{1,0:T(1,128)}', space=vmem, size = 0x12000, scoped, tag = 'internal scratch']
  %s0 = inlined_call_operand.vmem [shape: bf16[2,8,8,32], index: 0, kind: input, shape index: {}]
  %s1 = inlined_call_operand.vmem [shape: bf16[256,64], index: 1, kind: input, shape index: {}]
  %s2 = inlined_call_operand.vmem [shape: bf16[8,32,8], index: 2, kind: input, shape index: {}]
  %s3 = inlined_call_operand.vmem [shape: bf16[64,512], index: 3, kind: input, shape index: {}]
  %s4 = inlined_call_operand.vmem [shape: bf16[64,512], index: 4, kind: input, shape index: {}]
  %s5 = inlined_call_operand.hbm [shape: bf16[2,8,512], index: 5, kind: output, shape index: {}]
  %s6 = sld [smem:[#allocation0]]
  $region53: #{tpu_custom_call.1} parent=0
    _
  %s8 = ssub.s32 1, %s6
  %s9 = scalar_select 0, %s8, %s6
  $region1: #{tpu_custom_call.1} parent=0
    #allocation2 [shape = 'u8[16384]{0}', space=vmem, size = 0x4000, scoped, tag = 'output window, operand 0']
    #allocation3 [shape = 's32[2]{0}', space=sflag, size = 0x8, scoped, tag = 'scoped memory for tpu_custom_call.1']
    %10 = vsyncpa [#allocation3], 0
    %s11 = scalar_lea.sflag [#allocation3], 1
    %12 = vsyncpa %s11, 0
    loop: start=0, step=1, limit=4
    $region2: #{tpu_custom_call.1} parent=1 // loop_pre_header
      _
    $region3: #{tpu_custom_call.1} parent=1 // loop_header
      %s14 = sphi 0, %s18
      %p15 = scmp.ge.s32.totalorder %s14, 4
      %s24 = sphi 0, %s26
      %s27 = sphi 0, %s24
      %s28 = sphi 0, %s27
      %s44 = sphi 0, %s28
      %s48 = sphi 0, %s48
      %s50 = sphi 0, %s48
      %s51 = sphi 0, %s50
      %s65 = sphi 0, %s51
      %s69 = sphi 0, %s69
      %s71 = sphi 0, %s69
      %s72 = sphi 0, %s71
      %s86 = sphi 0, %s72
      %s90 = sphi 0, %s90
      %s92 = sphi 0, %s90
      %s93 = sphi 0, %s92
      %s107 = sphi 0, %s93
      %s111 = sphi 0, %s111
      %s113 = sphi 0, %s111
      %s114 = sphi 0, %s113
      %s128 = sphi 0, %s114
      %s134 = sphi 0, %s136
      %s137 = sphi 0, %s134
      %s138 = sphi 0, %s137
      %s154 = sphi 0, %s138
    $region4: #{tpu_custom_call.1} parent=1 // loop_header_branch
      %17 = sbr.rel (%p15) target = $region8
    $region5: #{tpu_custom_call.1} parent=1 // loop_body
      %s19 = ssub.s32 %s14, 1
      %s20 = ssub.s32 %s14, 2
      %s21 = sadd.s32 %s14, 1
      %s22 = ssub.s32 %s14, %s21
      %p23 = scmp.eq.s32.totalorder %s22, 0
      %s25 = sadd.s32 %s24, 1
      %s26 = scalar_select %p23, %s24, %s25
      %p29 = pneg %p23
      %p30 = scmp.eq.s32.totalorder %s14, 1
      %p31 = por %p29, %p30
      %p32 = scmp.ne.s32.totalorder %s24, %s27
      %p33 = scmp.eq.s32.totalorder %s14, 0
      %p34 = por %p32, %p33
      %p35 = scmp.ne.s32.totalorder %s24, %s27
      %p36 = scmp.eq.s32.totalorder %s19, 1
      %p37 = por %p35, %p36
      %p38 = scmp.ne.s32.totalorder %s27, %s28
      %p39 = scmp.eq.s32.totalorder %s19, 0
      %p40 = por %p38, %p39
      %p41 = scmp.ne.s32.totalorder %s27, %s28
      %p42 = scmp.eq.s32.totalorder %s20, 1
      %p43 = por %p41, %p42
      %p45 = scmp.ne.s32.totalorder %s28, %s44
      %p46 = scmp.eq.s32.totalorder %s20, 0
      %p47 = por %p45, %p46
      %s49 = sadd.s32 %s48, 1
      %p52 = scmp.eq.s32.totalorder %s14, 1
      %p53 = scmp.ne.s32.totalorder %s48, %s50
      %p54 = scmp.eq.s32.totalorder %s14, 0
      %p55 = por %p53, %p54
      %p56 = scmp.ne.s32.totalorder %s48, %s50
      %p57 = scmp.eq.s32.totalorder %s19, 1
      %p58 = por %p56, %p57
      %p59 = scmp.ne.s32.totalorder %s50, %s51
      %p60 = scmp.eq.s32.totalorder %s19, 0
      %p61 = por %p59, %p60
      %p62 = scmp.ne.s32.totalorder %s50, %s51
      %p63 = scmp.eq.s32.totalorder %s20, 1
      %p64 = por %p62, %p63
      %p66 = scmp.ne.s32.totalorder %s51, %s65
      %p67 = scmp.eq.s32.totalorder %s20, 0
      %p68 = por %p66, %p67
      %s70 = sadd.s32 %s69, 1
      %p73 = scmp.eq.s32.totalorder %s14, 1
      %p74 = scmp.ne.s32.totalorder %s69, %s71
      %p75 = scmp.eq.s32.totalorder %s14, 0
      %p76 = por %p74, %p75
      %p77 = scmp.ne.s32.totalorder %s69, %s71
      %p78 = scmp.eq.s32.totalorder %s19, 1
      %p79 = por %p77, %p78
      %p80 = scmp.ne.s32.totalorder %s71, %s72
      %p81 = scmp.eq.s32.totalorder %s19, 0
      %p82 = por %p80, %p81
      %p83 = scmp.ne.s32.totalorder %s71, %s72
      %p84 = scmp.eq.s32.totalorder %s20, 1
      %p85 = por %p83, %p84
      %p87 = scmp.ne.s32.totalorder %s72, %s86
      %p88 = scmp.eq.s32.totalorder %s20, 0
      %p89 = por %p87, %p88
      %s91 = sadd.s32 %s90, 1
      %p94 = scmp.eq.s32.totalorder %s14, 1
      %p95 = scmp.ne.s32.totalorder %s90, %s92
      %p96 = scmp.eq.s32.totalorder %s14, 0
      %p97 = por %p95, %p96
      %p98 = scmp.ne.s32.totalorder %s90, %s92
      %p99 = scmp.eq.s32.totalorder %s19, 1
      %p100 = por %p98, %p99
      %p101 = scmp.ne.s32.totalorder %s92, %s93
      %p102 = scmp.eq.s32.totalorder %s19, 0
      %p103 = por %p101, %p102
      %p104 = scmp.ne.s32.totalorder %s92, %s93
      %p105 = scmp.eq.s32.totalorder %s20, 1
      %p106 = por %p104, %p105
      %p108 = scmp.ne.s32.totalorder %s93, %s107
      %p109 = scmp.eq.s32.totalorder %s20, 0
      %p110 = por %p108, %p109
      %s112 = sadd.s32 %s111, 1
      %p115 = scmp.eq.s32.totalorder %s14, 1
      %p116 = scmp.ne.s32.totalorder %s111, %s113
      %p117 = scmp.eq.s32.totalorder %s14, 0
      %p118 = por %p116, %p117
      %p119 = scmp.ne.s32.totalorder %s111, %s113
      %p120 = scmp.eq.s32.totalorder %s19, 1
      %p121 = por %p119, %p120
      %p122 = scmp.ne.s32.totalorder %s113, %s114
      %p123 = scmp.eq.s32.totalorder %s19, 0
      %p124 = por %p122, %p123
      %p125 = scmp.ne.s32.totalorder %s113, %s114
      %p126 = scmp.eq.s32.totalorder %s20, 1
      %p127 = por %p125, %p126
      %p129 = scmp.ne.s32.totalorder %s114, %s128
      %p130 = scmp.eq.s32.totalorder %s20, 0
      %p131 = por %p129, %p130
      %s132 = ssub.s32 %s14, %s21
      %p133 = scmp.eq.s32.totalorder %s132, 0
      %s135 = sadd.s32 %s134, 1
      %s136 = scalar_select %p133, %s134, %s135
      %p139 = pneg %p133
      %p140 = scmp.eq.s32.totalorder %s14, 1
      %p141 = por %p139, %p140
      %p142 = scmp.ne.s32.totalorder %s134, %s137
      %p143 = scmp.eq.s32.totalorder %s14, 0
      %p144 = por %p142, %p143
      %p145 = scmp.ne.s32.totalorder %s134, %s137
      %p146 = scmp.eq.s32.totalorder %s19, 1
      %p147 = por %p145, %p146
      %p148 = scmp.ne.s32.totalorder %s137, %s138
      %p149 = scmp.eq.s32.totalorder %s19, 0
      %p150 = por %p148, %p149
      %p151 = scmp.ne.s32.totalorder %s137, %s138
      %p152 = scmp.eq.s32.totalorder %s20, 1
      %p153 = por %p151, %p152
      %p155 = scmp.ne.s32.totalorder %s138, %s154
      %p156 = scmp.eq.s32.totalorder %s20, 0
      %p157 = por %p155, %p156
      %p158 = scmp.le.s32.totalorder 1, %s14
      %p159 = scmp.lt.s32.totalorder %s14, 3
      %p160 = pnand %p158, %p159
      %p161 = pneg %p160
      // Predicated region
      $region9: #{tpu_custom_call.1} parent=5 // pred_check
        _
      $region10: #{tpu_custom_call.1} parent=5 // pred_check_branch
        %163 = sbr.rel (%p160) target = $region12
      $region11: #{tpu_custom_call.1} parent=5 // pred_region
        %s164 = ssub.s32 %s14, 1
        // Predicated region
        $region13: #{tpu_custom_call.1} parent=11 // pred_check
          %p165 = pneg %p61
        $region14: #{tpu_custom_call.1} parent=11 // pred_check_branch
          %167 = sbr.rel (%p165) target = $region16
        $region15: #{tpu_custom_call.1} parent=11 // pred_region
          _
        $region16: #{tpu_custom_call.1} parent=11 // pred_fallthru
          _
        // Predicated region
        $region17: #{tpu_custom_call.1} parent=11 // pred_check
          %p168 = pneg %p82
        $region18: #{tpu_custom_call.1} parent=11 // pred_check_branch
          %170 = sbr.rel (%p168) target = $region20
        $region19: #{tpu_custom_call.1} parent=11 // pred_region
          _
        $region20: #{tpu_custom_call.1} parent=11 // pred_fallthru
          _
        // Predicated region
        $region21: #{tpu_custom_call.1} parent=11 // pred_check
          %p171 = pneg %p103
        $region22: #{tpu_custom_call.1} parent=11 // pred_check_branch
          %173 = sbr.rel (%p171) target = $region24
        $region23: #{tpu_custom_call.1} parent=11 // pred_region
          _
        $region24: #{tpu_custom_call.1} parent=11 // pred_fallthru
          _
        // Predicated region
        $region25: #{tpu_custom_call.1} parent=11 // pred_check
          %p174 = pneg %p124
        $region26: #{tpu_custom_call.1} parent=11 // pred_check_branch
          %176 = sbr.rel (%p174) target = $region28
        $region27: #{tpu_custom_call.1} parent=11 // pred_region
          _
        $region28: #{tpu_custom_call.1} parent=11 // pred_fallthru
          _
      $region12: #{tpu_custom_call.1} parent=5 // pred_fallthru
        _
      %p177 = scmp.lt.s32.totalorder %s14, 2
      // Predicated region
      $region29: #{tpu_custom_call.1} parent=5 // pred_check
        %p178 = pneg %p177
      $region30: #{tpu_custom_call.1} parent=5 // pred_check_branch
        %180 = sbr.rel (%p178) target = $region32
      $region31: #{tpu_custom_call.1} parent=5 // pred_region
        // Predicated region
        $region33: #{tpu_custom_call.1} parent=31 // pred_check
          %p181 = pneg %p34
        $region34: #{tpu_custom_call.1} parent=31 // pred_check_branch
          %183 = sbr.rel (%p181) target = $region36
        $region35: #{tpu_custom_call.1} parent=31 // pred_region
          %p184 = scmp.lt.s32.totalorder %s14, 1
          %s185 = scalar_select %p184, %s14, 1
          %s186 = smul.addr %s185, 8
          %s187 = smul.addr %s186, 4
          %s188 = scalar_lea.vmem %s0, %s187
        $region36: #{tpu_custom_call.1} parent=31 // pred_fallthru
          _
      $region32: #{tpu_custom_call.1} parent=5 // pred_fallthru
        _
      %p189 = scmp.le.s32.totalorder 1, %s14
      %p190 = scmp.lt.s32.totalorder %s14, 3
      %p191 = pnand %p189, %p190
      %p192 = pneg %p191
      // Predicated region
      $region37: #{tpu_custom_call.1} parent=5 // pred_check
        _
      $region38: #{tpu_custom_call.1} parent=5 // pred_check_branch
        %194 = sbr.rel (%p191) target = $region40
      $region39: #{tpu_custom_call.1} parent=5 // pred_region
        %s195 = ssub.s32 %s14, 1
        %p196 = scmp.lt.s32.totalorder %s19, 1
        %s197 = scalar_select %p196, %s19, 1
        %s198 = smul.addr %s197, 8
        %s199 = smul.addr %s198, 4
        %s200 = scalar_lea.vmem %s0, %s199
        %p201 = pneg %p40
        %p202 = pneg %p37
        %p203 = pneg %p61
        %p204 = pneg %p58
        %p205 = pneg %p82
        %p206 = pneg %p79
        %p207 = pneg %p103
        %p208 = pneg %p100
        %p209 = pneg %p124
        %p210 = pneg %p121
        %p211 = pneg %p150
        %p212 = pneg %p147
        %s213 = sand.u32 %s137, 1
        %s214 = scalar_lea.sflag [#allocation3], %s213
        %s215 = sand.u32 %s137, 1
        %s216 = smul.addr %s215, 16
        %s217 = scalar_lea.vmem [#allocation2], %s216
        %p218 = scmp.lt.s32.totalorder %s19, 1
        %s219 = scalar_select %p218, %s19, 1
        %s220 = smul.addr %s219, 8
        %s221 = smul.addr %s220, 4
        %s222 = scalar_lea.vmem %s0, %s221
        %v224 = vld [vmem:[%s222] sm:$0xf]
        %v225 = vld [vmem:[%s222 + $0x4] sm:$0xf]
        %v226 = vld [vmem:[%s222 + $0x8] sm:$0xf]
        %v227 = vld [vmem:[%s222 + $0xc] sm:$0xf]
        %v228 = vld [vmem:[%s222 + $0x10] sm:$0xf]
        %v229 = vld [vmem:[%s222 + $0x14] sm:$0xf]
        %v230 = vld [vmem:[%s222 + $0x18] sm:$0xf]
        %v231 = vld [vmem:[%s222 + $0x1c] sm:$0xf]
        %v232 = vcombine.low %v224, %v228
        %v234 = vunpack.c.l.s4 1983009808
        %v235 = vunpack.c.0.s8 %v234
        %v236 = vlaneseq
        %v237 = vshrl.u32 %v236, 7
        %v238 = vsub.s32 %v235, %v237
        %v239 = vrot.slane %v232, %v238
        %v240 = vcombine.low %v226, %v230
        %v242 = vunpack.c.l.s4 1983009808
        %v243 = vunpack.c.0.s8 %v242
        %v244 = vlaneseq
        %v245 = vshrl.u32 %v244, 7
        %v246 = vsub.s32 %v243, %v245
        %v247 = vrot.slane %v240, %v246
        %v248 = vcombine.low %v239, %v247
        %v249 = vcombine.high %v239, %v247
        %v251 = vunpack.c.l.s4 1934713408
        %v252 = vunpack.c.0.s8 %v251
        %v253 = vlaneseq
        %v254 = vshrl.u32 %v253, 7
        %v255 = vsub.s32 %v252, %v254
        %v256 = vrot.slane %v248, %v255
        %v258 = vunpack.c.l.s4 1934713408
        %v259 = vunpack.c.0.s8 %v258
        %v260 = vlaneseq
        %v261 = vshrl.u32 %v260, 7
        %v262 = vsub.s32 %v259, %v261
        %v263 = vrot.slane %v249, %v262
        %v264 = vcombine.high %v256, 0
        %v265 = vcombine.high %v263, 0
        %v266 = vcombine.low %v225, %v229
        %v268 = vunpack.c.l.s4 1983009808
        %v269 = vunpack.c.0.s8 %v268
        %v270 = vlaneseq
        %v271 = vshrl.u32 %v270, 7
        %v272 = vsub.s32 %v269, %v271
        %v273 = vrot.slane %v266, %v272
        %v274 = vcombine.low %v227, %v231
        %v276 = vunpack.c.l.s4 1983009808
        %v277 = vunpack.c.0.s8 %v276
        %v278 = vlaneseq
        %v279 = vshrl.u32 %v278, 7
        %v280 = vsub.s32 %v277, %v279
        %v281 = vrot.slane %v274, %v280
        %v282 = vcombine.low %v273, %v281
        %v283 = vcombine.high %v273, %v281
        %v285 = vunpack.c.l.s4 1934713408
        %v286 = vunpack.c.0.s8 %v285
        %v287 = vlaneseq
        %v288 = vshrl.u32 %v287, 7
        %v289 = vsub.s32 %v286, %v288
        %v290 = vrot.slane %v282, %v289
        %v292 = vunpack.c.l.s4 1934713408
        %v293 = vunpack.c.0.s8 %v292
        %v294 = vlaneseq
        %v295 = vshrl.u32 %v294, 7
        %v296 = vsub.s32 %v293, %v295
        %v297 = vrot.slane %v283, %v296
        %v298 = vcombine.high %v290, 0
        %v299 = vcombine.high %v297, 0
        %v302 = vpack.i.b16 %v290, %v256
        %v303 = vshrl.u32 %v256, 16
        %v304 = vshrl.u32 %v290, 16
        %v305 = vpack.i.b16 %v304, %v303
        %v308 = vpack.i.b16 %v298, %v264
        %v309 = vshrl.u32 %v264, 16
        %v310 = vshrl.u32 %v298, 16
        %v311 = vpack.i.b16 %v310, %v309
        %v314 = vpack.i.b16 %v297, %v263
        %v315 = vshrl.u32 %v263, 16
        %v316 = vshrl.u32 %v297, 16
        %v317 = vpack.i.b16 %v316, %v315
        %v320 = vpack.i.b16 %v299, %v265
        %v321 = vshrl.u32 %v265, 16
        %v322 = vshrl.u32 %v299, 16
        %v323 = vpack.i.b16 %v322, %v321
        %v324 = vunpack.c.l.b16 %v305
        %v325 = vpack.c.b16 %v324, %v324
        %326 = vrot.lane.b32.xlu0 %v325, 32
        %v327 = vpop.permute.xlu0 %326
        %v328 = vunpack.c.l.b16 %v308
        %v329 = vpack.c.b16 %v328, %v328
        %330 = vrot.lane.b32.xlu0 %v329, 64
        %v331 = vpop.permute.xlu0 %330
        %v332 = vunpack.c.l.b16 %v311
        %v333 = vpack.c.b16 %v332, %v332
        %334 = vrot.lane.b32.xlu0 %v333, 96
        %v335 = vpop.permute.xlu0 %334
        %v336 = vunpack.c.l.b16 %v317
        %v337 = vpack.c.b16 %v336, %v336
        %338 = vrot.lane.b32.xlu0 %v337, 32
        %v339 = vpop.permute.xlu0 %338
        %v340 = vunpack.c.l.b16 %v320
        %v341 = vpack.c.b16 %v340, %v340
        %342 = vrot.lane.b32.xlu0 %v341, 64
        %v343 = vpop.permute.xlu0 %342
        %v344 = vunpack.c.l.b16 %v323
        %v345 = vpack.c.b16 %v344, %v344
        %346 = vrot.lane.b32.xlu0 %v345, 96
        %v347 = vpop.permute.xlu0 %346
        %vm348 = vcmask 261120
        %v351 = vsel %vm348, %v302, %v327
        %vm352 = vcmask 523264
        %v354 = vsel %vm352, %v351, %v331
        %vm355 = vcmask 785408
        %v357 = vsel %vm355, %v354, %v335
        %v361 = vsel %vm348, %v314, %v339
        %v363 = vsel %vm352, %v361, %v343
        %v365 = vsel %vm355, %v363, %v347
        %v367 = vld [vmem:[%s1] sm:$0xf]
        %v368 = vld [vmem:[%s1 + $0x4] sm:$0xf]
        %v369 = vld [vmem:[%s1 + $0x8] sm:$0xf]
        %v370 = vld [vmem:[%s1 + $0xc] sm:$0xf]
        %v371 = vld [vmem:[%s1 + $0x10] sm:$0xf]
        %v372 = vld [vmem:[%s1 + $0x14] sm:$0xf]
        %v373 = vld [vmem:[%s1 + $0x18] sm:$0xf]
        %v374 = vld [vmem:[%s1 + $0x1c] sm:$0xf]
        %v375 = vld [vmem:[%s1 + $0x20] sm:$0xf]
        %v376 = vld [vmem:[%s1 + $0x24] sm:$0xf]
        %v377 = vld [vmem:[%s1 + $0x28] sm:$0xf]
        %v378 = vld [vmem:[%s1 + $0x2c] sm:$0xf]
        %v379 = vld [vmem:[%s1 + $0x30] sm:$0xf]
        %v380 = vld [vmem:[%s1 + $0x34] sm:$0xf]
        %v381 = vld [vmem:[%s1 + $0x38] sm:$0xf]
        %v382 = vld [vmem:[%s1 + $0x3c] sm:$0xf]
        %v383 = vld [vmem:[%s1 + $0x40] sm:$0xf]
        %v384 = vld [vmem:[%s1 + $0x44] sm:$0xf]
        %v385 = vld [vmem:[%s1 + $0x48] sm:$0xf]
        %v386 = vld [vmem:[%s1 + $0x4c] sm:$0xf]
        %v387 = vld [vmem:[%s1 + $0x50] sm:$0xf]
        %v388 = vld [vmem:[%s1 + $0x54] sm:$0xf]
        %v389 = vld [vmem:[%s1 + $0x58] sm:$0xf]
        %v390 = vld [vmem:[%s1 + $0x5c] sm:$0xf]
        %v391 = vld [vmem:[%s1 + $0x60] sm:$0xf]
        %v392 = vld [vmem:[%s1 + $0x64] sm:$0xf]
        %v393 = vld [vmem:[%s1 + $0x68] sm:$0xf]
        %v394 = vld [vmem:[%s1 + $0x6c] sm:$0xf]
        %v395 = vld [vmem:[%s1 + $0x70] sm:$0xf]
        %v396 = vld [vmem:[%s1 + $0x74] sm:$0xf]
        %v397 = vld [vmem:[%s1 + $0x78] sm:$0xf]
        %v398 = vld [vmem:[%s1 + $0x7c] sm:$0xf]
        %v431 = vunpack.c.l.b16 %v367
        %v432 = vunpack.c.l.b16 %v368
        %v433 = vunpack.c.l.b16 %v369
        %v434 = vunpack.c.l.b16 %v370
        %v435 = vunpack.c.l.b16 %v371
        %v436 = vunpack.c.l.b16 %v372
        %v437 = vunpack.c.l.b16 %v373
        %v438 = vunpack.c.l.b16 %v374
        %v439 = vunpack.c.l.b16 %v375
        %v440 = vunpack.c.l.b16 %v376
        %v441 = vunpack.c.l.b16 %v377
        %v442 = vunpack.c.l.b16 %v378
        %v443 = vunpack.c.l.b16 %v379
        %v444 = vunpack.c.l.b16 %v380
        %v445 = vunpack.c.l.b16 %v381
        %v446 = vunpack.c.l.b16 %v382
        %v447 = vunpack.c.l.b16 %v383
        %v448 = vunpack.c.l.b16 %v384
        %v449 = vunpack.c.l.b16 %v385
        %v450 = vunpack.c.l.b16 %v386
        %v451 = vunpack.c.l.b16 %v387
        %v452 = vunpack.c.l.b16 %v388
        %v453 = vunpack.c.l.b16 %v389
        %v454 = vunpack.c.l.b16 %v390
        %v455 = vunpack.c.l.b16 %v391
        %v456 = vunpack.c.l.b16 %v392
        %v457 = vunpack.c.l.b16 %v393
        %v458 = vunpack.c.l.b16 %v394
        %v459 = vunpack.c.l.b16 %v395
        %v460 = vunpack.c.l.b16 %v396
        %v461 = vunpack.c.l.b16 %v397
        %v462 = vunpack.c.l.b16 %v398
        %v463 = vpack.c.b16 %v432, %v431
        %v464 = vpack.c.b16 %v434, %v433
        %v465 = vpack.c.b16 %v436, %v435
        %v466 = vpack.c.b16 %v438, %v437
        %v467 = vpack.c.b16 %v440, %v439
        %v468 = vpack.c.b16 %v442, %v441
        %v469 = vpack.c.b16 %v444, %v443
        %v470 = vpack.c.b16 %v446, %v445
        %v471 = vpack.c.b16 %v448, %v447
        %v472 = vpack.c.b16 %v450, %v449
        %v473 = vpack.c.b16 %v452, %v451
        %v474 = vpack.c.b16 %v454, %v453
        %v475 = vpack.c.b16 %v456, %v455
        %v476 = vpack.c.b16 %v458, %v457
        %v477 = vpack.c.b16 %v460, %v459
        %v478 = vpack.c.b16 %v462, %v461
        %495 = vmatprep.subr.bf16.mxu0 0
        %496 = vmatpush1.bf16.msra.mxu0 %v463
        %497 = vmatprep.subr.bf16.mxu0 0
        %498 = vmatpush1.bf16.msra.mxu0 %v464
        %499 = vmatprep.subr.bf16.mxu0 0
        %500 = vmatpush1.bf16.msra.mxu0 %v465
        %501 = vmatprep.subr.bf16.mxu0 0
        %502 = vmatpush1.bf16.msra.mxu0 %v466
        %503 = vmatprep.subr.bf16.mxu0 0
        %504 = vmatpush1.bf16.msra.mxu0 %v467
        %505 = vmatprep.subr.bf16.mxu0 0
        %506 = vmatpush1.bf16.msra.mxu0 %v468
        %507 = vmatprep.subr.bf16.mxu0 0
        %508 = vmatpush1.bf16.msra.mxu0 %v469
        %509 = vmatprep.subr.bf16.mxu0 0
        %510 = vmatpush1.bf16.msra.mxu0 %v470
        %511 = vmatprep.subr.bf16.mxu0 0
        %512 = vmatpush1.bf16.msra.mxu0 %v471
        %513 = vmatprep.subr.bf16.mxu0 0
        %514 = vmatpush1.bf16.msra.mxu0 %v472
        %515 = vmatprep.subr.bf16.mxu0 0
        %516 = vmatpush1.bf16.msra.mxu0 %v473
        %517 = vmatprep.subr.bf16.mxu0 0
        %518 = vmatpush1.bf16.msra.mxu0 %v474
        %519 = vmatprep.subr.bf16.mxu0 0
        %520 = vmatpush1.bf16.msra.mxu0 %v475
        %521 = vmatprep.subr.bf16.mxu0 0
        %522 = vmatpush1.bf16.msra.mxu0 %v476
        %523 = vmatprep.subr.bf16.mxu0 0
        %524 = vmatpush1.bf16.msra.mxu0 %v477
        %525 = vmatprep.subr.bf16.mxu0 0
        %526 = vmatpush1.bf16.msra.mxu0 %v478
        %527 = vmatprep.mubr.bf16.mxu0 %v365
        %528 = vmatmul.mubr.bf16.gmra.mrb[0].mxu0 %v357
        %v529 = vpop.f32.mrb[0].mxu0
        %v530 = vadd.f32 0.0, %v529
        %v531 = vpop.f32.mrb[0].mxu0
        %v532 = vpop.f32.mrb[0].mxu0
        %v533 = vpop.f32.mrb[0].mxu0
        %534 = vdwg.mxu0
        %v535 = vld [vmem:[%s2] sm:$0xf]
        %v536 = vld [vmem:[%s2 + $0x4] sm:$0xf]
        %v537 = vld [vmem:[%s2 + $0x8] sm:$0xf]
        %v538 = vld [vmem:[%s2 + $0xc] sm:$0xf]
        %v543 = vunpack.c.l.b16 %v535
        %v544 = vunpack.c.l.b16 %v536
        %v545 = vunpack.c.l.b16 %v537
        %v546 = vunpack.c.l.b16 %v538
        %v547 = vpack.c.b16 %v544, %v543
        %v548 = vpack.c.b16 %v546, %v545
        %v552 = vsel %vm348, %v224, 0
        %554 = vmatprep.subr.bf16.mxu0 0
        %555 = vmatpush1.bf16.msra.mxu0 %v547
        %556 = vmatprep.subr.bf16.mxu0 0
        %557 = vmatpush1.bf16.msra.mxu0 %v548
        %558 = vmatprep.subr.bf16.mxu0 0
        %559 = vmatpush1.bf16.msra.mxu0 0
        %560 = vmatprep.subr.bf16.mxu0 0
        %561 = vmatpush1.bf16.msra.mxu0 0
        %562 = vmatprep.subr.bf16.mxu0 0
        %563 = vmatpush1.bf16.msra.mxu0 0
        %564 = vmatprep.subr.bf16.mxu0 0
        %565 = vmatpush1.bf16.msra.mxu0 0
        %566 = vmatprep.subr.bf16.mxu0 0
        %567 = vmatpush1.bf16.msra.mxu0 0
        %568 = vmatprep.subr.bf16.mxu0 0
        %569 = vmatpush1.bf16.msra.mxu0 0
        %570 = vmatprep.subr.bf16.mxu0 0
        %571 = vmatpush1.bf16.msra.mxu0 0
        %572 = vmatprep.subr.bf16.mxu0 0
        %573 = vmatpush1.bf16.msra.mxu0 0
        %574 = vmatprep.subr.bf16.mxu0 0
        %575 = vmatpush1.bf16.msra.mxu0 0
        %576 = vmatprep.subr.bf16.mxu0 0
        %577 = vmatpush1.bf16.msra.mxu0 0
        %578 = vmatprep.subr.bf16.mxu0 0
        %579 = vmatpush1.bf16.msra.mxu0 0
        %580 = vmatprep.subr.bf16.mxu0 0
        %581 = vmatpush1.bf16.msra.mxu0 0
        %582 = vmatprep.subr.bf16.mxu0 0
        %583 = vmatpush1.bf16.msra.mxu0 0
        %584 = vmatprep.subr.bf16.mxu0 0
        %585 = vmatpush1.bf16.msra.mxu0 0
        %586 = vmatprep.mubr.bf16.mxu0 0
        %587 = vmatmul.mubr.bf16.gmra.mrb[0].mxu0 %v552
        %v588 = vpop.f32.mrb[0].mxu0
        %v589 = vadd.f32 0.0, %v588
        %v590 = vpop.f32.mrb[0].mxu0
        %v591 = vpop.f32.mrb[0].mxu0
        %v592 = vpop.f32.mrb[0].mxu0
        %593 = vdwg.mxu0
        %s594 = scalar_lea.vmem %s2, 16
        %v595 = vld [vmem:[%s594] sm:$0xf]
        %v596 = vld [vmem:[%s594 + $0x4] sm:$0xf]
        %v597 = vld [vmem:[%s594 + $0x8] sm:$0xf]
        %v598 = vld [vmem:[%s594 + $0xc] sm:$0xf]
        %v603 = vunpack.c.l.b16 %v595
        %v604 = vunpack.c.l.b16 %v596
        %v605 = vunpack.c.l.b16 %v597
        %v606 = vunpack.c.l.b16 %v598
        %v607 = vpack.c.b16 %v604, %v603
        %v608 = vpack.c.b16 %v606, %v605
        %v612 = vsel %vm348, %v225, 0
        %614 = vmatprep.subr.bf16.mxu0 0
        %615 = vmatpush1.bf16.msra.mxu0 %v607
        %616 = vmatprep.subr.bf16.mxu0 0
        %617 = vmatpush1.bf16.msra.mxu0 %v608
        %618 = vmatprep.subr.bf16.mxu0 0
        %619 = vmatpush1.bf16.msra.mxu0 0
        %620 = vmatprep.subr.bf16.mxu0 0
        %621 = vmatpush1.bf16.msra.mxu0 0
        %622 = vmatprep.subr.bf16.mxu0 0
        %623 = vmatpush1.bf16.msra.mxu0 0
        %624 = vmatprep.subr.bf16.mxu0 0
        %625 = vmatpush1.bf16.msra.mxu0 0
        %626 = vmatprep.subr.bf16.mxu0 0
        %627 = vmatpush1.bf16.msra.mxu0 0
        %628 = vmatprep.subr.bf16.mxu0 0
        %629 = vmatpush1.bf16.msra.mxu0 0
        %630 = vmatprep.subr.bf16.mxu0 0
        %631 = vmatpush1.bf16.msra.mxu0 0
        %632 = vmatprep.subr.bf16.mxu0 0
        %633 = vmatpush1.bf16.msra.mxu0 0
        %634 = vmatprep.subr.bf16.mxu0 0
        %635 = vmatpush1.bf16.msra.mxu0 0
        %636 = vmatprep.subr.bf16.mxu0 0
        %637 = vmatpush1.bf16.msra.mxu0 0
        %638 = vmatprep.subr.bf16.mxu0 0
        %639 = vmatpush1.bf16.msra.mxu0 0
        %640 = vmatprep.subr.bf16.mxu0 0
        %641 = vmatpush1.bf16.msra.mxu0 0
        %642 = vmatprep.subr.bf16.mxu0 0
        %643 = vmatpush1.bf16.msra.mxu0 0
        %644 = vmatprep.subr.bf16.mxu0 0
        %645 = vmatpush1.bf16.msra.mxu0 0
        %646 = vmatprep.mubr.bf16.mxu0 0
        %647 = vmatmul.mubr.bf16.gmra.mrb[0].mxu0 %v612
        %v648 = vpop.f32.mrb[0].mxu0
        %v649 = vadd.f32 0.0, %v648
        %v650 = vpop.f32.mrb[0].mxu0
        %v651 = vpop.f32.mrb[0].mxu0
        %v652 = vpop.f32.mrb[0].mxu0
        %653 = vdwg.mxu0
        %s654 = scalar_lea.vmem %s2, 32
        %v655 = vld [vmem:[%s654] sm:$0xf]
        %v656 = vld [vmem:[%s654 + $0x4] sm:$0xf]
        %v657 = vld [vmem:[%s654 + $0x8] sm:$0xf]
        %v658 = vld [vmem:[%s654 + $0xc] sm:$0xf]
        %v663 = vunpack.c.l.b16 %v655
        %v664 = vunpack.c.l.b16 %v656
        %v665 = vunpack.c.l.b16 %v657
        %v666 = vunpack.c.l.b16 %v658
        %v667 = vpack.c.b16 %v664, %v663
        %v668 = vpack.c.b16 %v666, %v665
        %v672 = vsel %vm348, %v226, 0
        %674 = vmatprep.subr.bf16.mxu0 0
        %675 = vmatpush1.bf16.msra.mxu0 %v667
        %676 = vmatprep.subr.bf16.mxu0 0
        %677 = vmatpush1.bf16.msra.mxu0 %v668
        %678 = vmatprep.subr.bf16.mxu0 0
        %679 = vmatpush1.bf16.msra.mxu0 0
        %680 = vmatprep.subr.bf16.mxu0 0
        %681 = vmatpush1.bf16.msra.mxu0 0
        %682 = vmatprep.subr.bf16.mxu0 0
        %683 = vmatpush1.bf16.msra.mxu0 0
        %684 = vmatprep.subr.bf16.mxu0 0
        %685 = vmatpush1.bf16.msra.mxu0 0
        %686 = vmatprep.subr.bf16.mxu0 0
        %687 = vmatpush1.bf16.msra.mxu0 0
        %688 = vmatprep.subr.bf16.mxu0 0
        %689 = vmatpush1.bf16.msra.mxu0 0
        %690 = vmatprep.subr.bf16.mxu0 0
        %691 = vmatpush1.bf16.msra.mxu0 0
        %692 = vmatprep.subr.bf16.mxu0 0
        %693 = vmatpush1.bf16.msra.mxu0 0
        %694 = vmatprep.subr.bf16.mxu0 0
        %695 = vmatpush1.bf16.msra.mxu0 0
        %696 = vmatprep.subr.bf16.mxu0 0
        %697 = vmatpush1.bf16.msra.mxu0 0
        %698 = vmatprep.subr.bf16.mxu0 0
        %699 = vmatpush1.bf16.msra.mxu0 0
        %700 = vmatprep.subr.bf16.mxu0 0
        %701 = vmatpush1.bf16.msra.mxu0 0
        %702 = vmatprep.subr.bf16.mxu0 0
        %703 = vmatpush1.bf16.msra.mxu0 0
        %704 = vmatprep.subr.bf16.mxu0 0
        %705 = vmatpush1.bf16.msra.mxu0 0
        %706 = vmatprep.mubr.bf16.mxu0 0
        %707 = vmatmul.mubr.bf16.gmra.mrb[0].mxu0 %v672
        %v708 = vpop.f32.mrb[0].mxu0
        %v709 = vadd.f32 0.0, %v708
        %v710 = vpop.f32.mrb[0].mxu0
        %v711 = vpop.f32.mrb[0].mxu0
        %v712 = vpop.f32.mrb[0].mxu0
        %713 = vdwg.mxu0
        %s714 = scalar_lea.vmem %s2, 48
        %v715 = vld [vmem:[%s714] sm:$0xf]
        %v716 = vld [vmem:[%s714 + $0x4] sm:$0xf]
        %v717 = vld [vmem:[%s714 + $0x8] sm:$0xf]
        %v718 = vld [vmem:[%s714 + $0xc] sm:$0xf]
        %v723 = vunpack.c.l.b16 %v715
        %v724 = vunpack.c.l.b16 %v716
        %v725 = vunpack.c.l.b16 %v717
        %v726 = vunpack.c.l.b16 %v718
        %v727 = vpack.c.b16 %v724, %v723
        %v728 = vpack.c.b16 %v726, %v725
        %v732 = vsel %vm348, %v227, 0
        %734 = vmatprep.subr.bf16.mxu0 0
        %735 = vmatpush1.bf16.msra.mxu0 %v727
        %736 = vmatprep.subr.bf16.mxu0 0
        %737 = vmatpush1.bf16.msra.mxu0 %v728
        %738 = vmatprep.subr.bf16.mxu0 0
        %739 = vmatpush1.bf16.msra.mxu0 0
        %740 = vmatprep.subr.bf16.mxu0 0
        %741 = vmatpush1.bf16.msra.mxu0 0
        %742 = vmatprep.subr.bf16.mxu0 0
        %743 = vmatpush1.bf16.msra.mxu0 0
        %744 = vmatprep.subr.bf16.mxu0 0
        %745 = vmatpush1.bf16.msra.mxu0 0
        %746 = vmatprep.subr.bf16.mxu0 0
        %747 = vmatpush1.bf16.msra.mxu0 0
        %748 = vmatprep.subr.bf16.mxu0 0
        %749 = vmatpush1.bf16.msra.mxu0 0
        %750 = vmatprep.subr.bf16.mxu0 0
        %751 = vmatpush1.bf16.msra.mxu0 0
        %752 = vmatprep.subr.bf16.mxu0 0
        %753 = vmatpush1.bf16.msra.mxu0 0
        %754 = vmatprep.subr.bf16.mxu0 0
        %755 = vmatpush1.bf16.msra.mxu0 0
        %756 = vmatprep.subr.bf16.mxu0 0
        %757 = vmatpush1.bf16.msra.mxu0 0
        %758 = vmatprep.subr.bf16.mxu0 0
        %759 = vmatpush1.bf16.msra.mxu0 0
        %760 = vmatprep.subr.bf16.mxu0 0
        %761 = vmatpush1.bf16.msra.mxu0 0
        %762 = vmatprep.subr.bf16.mxu0 0
        %763 = vmatpush1.bf16.msra.mxu0 0
        %764 = vmatprep.subr.bf16.mxu0 0
        %765 = vmatpush1.bf16.msra.mxu0 0
        %766 = vmatprep.mubr.bf16.mxu0 0
        %767 = vmatmul.mubr.bf16.gmra.mrb[0].mxu0 %v732
        %v768 = vpop.f32.mrb[0].mxu0
        %v769 = vadd.f32 0.0, %v768
        %v770 = vpop.f32.mrb[0].mxu0
        %v771 = vpop.f32.mrb[0].mxu0
        %v772 = vpop.f32.mrb[0].mxu0
        %773 = vdwg.mxu0
        %s774 = scalar_lea.vmem %s2, 64
        %v775 = vld [vmem:[%s774] sm:$0xf]
        %v776 = vld [vmem:[%s774 + $0x4] sm:$0xf]
        %v777 = vld [vmem:[%s774 + $0x8] sm:$0xf]
        %v778 = vld [vmem:[%s774 + $0xc] sm:$0xf]
        %v783 = vunpack.c.l.b16 %v775
        %v784 = vunpack.c.l.b16 %v776
        %v785 = vunpack.c.l.b16 %v777
        %v786 = vunpack.c.l.b16 %v778
        %v787 = vpack.c.b16 %v784, %v783
        %v788 = vpack.c.b16 %v786, %v785
        %v792 = vsel %vm348, %v228, 0
        %794 = vmatprep.subr.bf16.mxu0 0
        %795 = vmatpush1.bf16.msra.mxu0 %v787
        %796 = vmatprep.subr.bf16.mxu0 0
        %797 = vmatpush1.bf16.msra.mxu0 %v788
        %798 = vmatprep.subr.bf16.mxu0 0
        %799 = vmatpush1.bf16.msra.mxu0 0
        %800 = vmatprep.subr.bf16.mxu0 0
        %801 = vmatpush1.bf16.msra.mxu0 0
        %802 = vmatprep.subr.bf16.mxu0 0
        %803 = vmatpush1.bf16.msra.mxu0 0
        %804 = vmatprep.subr.bf16.mxu0 0
        %805 = vmatpush1.bf16.msra.mxu0 0
        %806 = vmatprep.subr.bf16.mxu0 0
        %807 = vmatpush1.bf16.msra.mxu0 0
        %808 = vmatprep.subr.bf16.mxu0 0
        %809 = vmatpush1.bf16.msra.mxu0 0
        %810 = vmatprep.subr.bf16.mxu0 0
        %811 = vmatpush1.bf16.msra.mxu0 0
        %812 = vmatprep.subr.bf16.mxu0 0
        %813 = vmatpush1.bf16.msra.mxu0 0
        %814 = vmatprep.subr.bf16.mxu0 0
        %815 = vmatpush1.bf16.msra.mxu0 0
        %816 = vmatprep.subr.bf16.mxu0 0
        %817 = vmatpush1.bf16.msra.mxu0 0
        %818 = vmatprep.subr.bf16.mxu0 0
        %819 = vmatpush1.bf16.msra.mxu0 0
        %820 = vmatprep.subr.bf16.mxu0 0
        %821 = vmatpush1.bf16.msra.mxu0 0
        %822 = vmatprep.subr.bf16.mxu0 0
        %823 = vmatpush1.bf16.msra.mxu0 0
        %824 = vmatprep.subr.bf16.mxu0 0
        %825 = vmatpush1.bf16.msra.mxu0 0
        %826 = vmatprep.mubr.bf16.mxu0 0
        %827 = vmatmul.mubr.bf16.gmra.mrb[0].mxu0 %v792
        %v828 = vpop.f32.mrb[0].mxu0
        %v829 = vadd.f32 0.0, %v828
        %v830 = vpop.f32.mrb[0].mxu0
        %v831 = vpop.f32.mrb[0].mxu0
        %v832 = vpop.f32.mrb[0].mxu0
        %833 = vdwg.mxu0
        %s834 = scalar_lea.vmem %s2, 80
        %v835 = vld [vmem:[%s834] sm:$0xf]
        %v836 = vld [vmem:[%s834 + $0x4] sm:$0xf]
        %v837 = vld [vmem:[%s834 + $0x8] sm:$0xf]
        %v838 = vld [vmem:[%s834 + $0xc] sm:$0xf]
        %v843 = vunpack.c.l.b16 %v835
        %v844 = vunpack.c.l.b16 %v836
        %v845 = vunpack.c.l.b16 %v837
        %v846 = vunpack.c.l.b16 %v838
        %v847 = vpack.c.b16 %v844, %v843
        %v848 = vpack.c.b16 %v846, %v845
        %v852 = vsel %vm348, %v229, 0
        %854 = vmatprep.subr.bf16.mxu0 0
        %855 = vmatpush1.bf16.msra.mxu0 %v847
        %856 = vmatprep.subr.bf16.mxu0 0
        %857 = vmatpush1.bf16.msra.mxu0 %v848
        %858 = vmatprep.subr.bf16.mxu0 0
        %859 = vmatpush1.bf16.msra.mxu0 0
        %860 = vmatprep.subr.bf16.mxu0 0
        %861 = vmatpush1.bf16.msra.mxu0 0
        %862 = vmatprep.subr.bf16.mxu0 0
        %863 = vmatpush1.bf16.msra.mxu0 0
        %864 = vmatprep.subr.bf16.mxu0 0
        %865 = vmatpush1.bf16.msra.mxu0 0
        %866 = vmatprep.subr.bf16.mxu0 0
        %867 = vmatpush1.bf16.msra.mxu0 0
        %868 = vmatprep.subr.bf16.mxu0 0
        %869 = vmatpush1.bf16.msra.mxu0 0
        %870 = vmatprep.subr.bf16.mxu0 0
        %871 = vmatpush1.bf16.msra.mxu0 0
        %872 = vmatprep.subr.bf16.mxu0 0
        %873 = vmatpush1.bf16.msra.mxu0 0
        %874 = vmatprep.subr.bf16.mxu0 0
        %875 = vmatpush1.bf16.msra.mxu0 0
        %876 = vmatprep.subr.bf16.mxu0 0
        %877 = vmatpush1.bf16.msra.mxu0 0
        %878 = vmatprep.subr.bf16.mxu0 0
        %879 = vmatpush1.bf16.msra.mxu0 0
        %880 = vmatprep.subr.bf16.mxu0 0
        %881 = vmatpush1.bf16.msra.mxu0 0
        %882 = vmatprep.subr.bf16.mxu0 0
        %883 = vmatpush1.bf16.msra.mxu0 0
        %884 = vmatprep.subr.bf16.mxu0 0
        %885 = vmatpush1.bf16.msra.mxu0 0
        %886 = vmatprep.mubr.bf16.mxu0 0
        %887 = vmatmul.mubr.bf16.gmra.mrb[0].mxu0 %v852
        %v888 = vpop.f32.mrb[0].mxu0
        %v889 = vadd.f32 0.0, %v888
        %v890 = vpop.f32.mrb[0].mxu0
        %v891 = vpop.f32.mrb[0].mxu0
        %v892 = vpop.f32.mrb[0].mxu0
        %893 = vdwg.mxu0
        %s894 = scalar_lea.vmem %s2, 96
        %v895 = vld [vmem:[%s894] sm:$0xf]
        %v896 = vld [vmem:[%s894 + $0x4] sm:$0xf]
        %v897 = vld [vmem:[%s894 + $0x8] sm:$0xf]
        %v898 = vld [vmem:[%s894 + $0xc] sm:$0xf]
        %v903 = vunpack.c.l.b16 %v895
        %v904 = vunpack.c.l.b16 %v896
        %v905 = vunpack.c.l.b16 %v897
        %v906 = vunpack.c.l.b16 %v898
        %v907 = vpack.c.b16 %v904, %v903
        %v908 = vpack.c.b16 %v906, %v905
        %v912 = vsel %vm348, %v230, 0
        %914 = vmatprep.subr.bf16.mxu0 0
        %915 = vmatpush1.bf16.msra.mxu0 %v907
        %916 = vmatprep.subr.bf16.mxu0 0
        %917 = vmatpush1.bf16.msra.mxu0 %v908
        %918 = vmatprep.subr.bf16.mxu0 0
        %919 = vmatpush1.bf16.msra.mxu0 0
        %920 = vmatprep.subr.bf16.mxu0 0
        %921 = vmatpush1.bf16.msra.mxu0 0
        %922 = vmatprep.subr.bf16.mxu0 0
        %923 = vmatpush1.bf16.msra.mxu0 0
        %924 = vmatprep.subr.bf16.mxu0 0
        %925 = vmatpush1.bf16.msra.mxu0 0
        %926 = vmatprep.subr.bf16.mxu0 0
        %927 = vmatpush1.bf16.msra.mxu0 0
        %928 = vmatprep.subr.bf16.mxu0 0
        %929 = vmatpush1.bf16.msra.mxu0 0
        %930 = vmatprep.subr.bf16.mxu0 0
        %931 = vmatpush1.bf16.msra.mxu0 0
        %932 = vmatprep.subr.bf16.mxu0 0
        %933 = vmatpush1.bf16.msra.mxu0 0
        %934 = vmatprep.subr.bf16.mxu0 0
        %935 = vmatpush1.bf16.msra.mxu0 0
        %936 = vmatprep.subr.bf16.mxu0 0
        %937 = vmatpush1.bf16.msra.mxu0 0
        %938 = vmatprep.subr.bf16.mxu0 0
        %939 = vmatpush1.bf16.msra.mxu0 0
        %940 = vmatprep.subr.bf16.mxu0 0
        %941 = vmatpush1.bf16.msra.mxu0 0
        %942 = vmatprep.subr.bf16.mxu0 0
        %943 = vmatpush1.bf16.msra.mxu0 0
        %944 = vmatprep.subr.bf16.mxu0 0
        %945 = vmatpush1.bf16.msra.mxu0 0
        %946 = vmatprep.mubr.bf16.mxu0 0
        %947 = vmatmul.mubr.bf16.gmra.mrb[0].mxu0 %v912
        %v948 = vpop.f32.mrb[0].mxu0
        %v949 = vadd.f32 0.0, %v948
        %v950 = vpop.f32.mrb[0].mxu0
        %v951 = vpop.f32.mrb[0].mxu0
        %v952 = vpop.f32.mrb[0].mxu0
        %953 = vdwg.mxu0
        %s954 = scalar_lea.vmem %s2, 112
        %v955 = vld [vmem:[%s954] sm:$0xf]
        %v956 = vld [vmem:[%s954 + $0x4] sm:$0xf]
        %v957 = vld [vmem:[%s954 + $0x8] sm:$0xf]
        %v958 = vld [vmem:[%s954 + $0xc] sm:$0xf]
        %v963 = vunpack.c.l.b16 %v955
        %v964 = vunpack.c.l.b16 %v956
        %v965 = vunpack.c.l.b16 %v957
        %v966 = vunpack.c.l.b16 %v958
        %v967 = vpack.c.b16 %v964, %v963
        %v968 = vpack.c.b16 %v966, %v965
        %v972 = vsel %vm348, %v231, 0
        %974 = vmatprep.subr.bf16.mxu0 0
        %975 = vmatpush1.bf16.msra.mxu0 %v967
        %976 = vmatprep.subr.bf16.mxu0 0
        %977 = vmatpush1.bf16.msra.mxu0 %v968
        %978 = vmatprep.subr.bf16.mxu0 0
        %979 = vmatpush1.bf16.msra.mxu0 0
        %980 = vmatprep.subr.bf16.mxu0 0
        %981 = vmatpush1.bf16.msra.mxu0 0
        %982 = vmatprep.subr.bf16.mxu0 0
        %983 = vmatpush1.bf16.msra.mxu0 0
        %984 = vmatprep.subr.bf16.mxu0 0
        %985 = vmatpush1.bf16.msra.mxu0 0
        %986 = vmatprep.subr.bf16.mxu0 0
        %987 = vmatpush1.bf16.msra.mxu0 0
        %988 = vmatprep.subr.bf16.mxu0 0
        %989 = vmatpush1.bf16.msra.mxu0 0
        %990 = vmatprep.subr.bf16.mxu0 0
        %991 = vmatpush1.bf16.msra.mxu0 0
        %992 = vmatprep.subr.bf16.mxu0 0
        %993 = vmatpush1.bf16.msra.mxu0 0
        %994 = vmatprep.subr.bf16.mxu0 0
        %995 = vmatpush1.bf16.msra.mxu0 0
        %996 = vmatprep.subr.bf16.mxu0 0
        %997 = vmatpush1.bf16.msra.mxu0 0
        %998 = vmatprep.subr.bf16.mxu0 0
        %999 = vmatpush1.bf16.msra.mxu0 0
        %1000 = vmatprep.subr.bf16.mxu0 0
        %1001 = vmatpush1.bf16.msra.mxu0 0
        %1002 = vmatprep.subr.bf16.mxu0 0
        %1003 = vmatpush1.bf16.msra.mxu0 0
        %1004 = vmatprep.subr.bf16.mxu0 0
        %1005 = vmatpush1.bf16.msra.mxu0 0
        %1006 = vmatprep.mubr.bf16.mxu0 0
        %1007 = vmatmul.mubr.bf16.gmra.mrb[0].mxu0 %v972
        %v1008 = vpop.f32.mrb[0].mxu0
        %v1009 = vadd.f32 0.0, %v1008
        %v1010 = vpop.f32.mrb[0].mxu0
        %v1011 = vpop.f32.mrb[0].mxu0
        %v1012 = vpop.f32.mrb[0].mxu0
        %1013 = vdwg.mxu0
        %v1014 = vcombine.low %v589, %v709
        %v1015 = vcombine.high %v589, %v709
        %v1017 = vunpack.c.l.s4 1983009808
        %v1018 = vunpack.c.0.s8 %v1017
        %v1019 = vlaneseq
        %v1020 = vshrl.u32 %v1019, 7
        %v1021 = vsub.s32 %v1018, %v1020
        %v1022 = vrot.slane %v1014, %v1021
        %v1024 = vunpack.c.l.s4 1983009808
        %v1025 = vunpack.c.0.s8 %v1024
        %v1026 = vlaneseq
        %v1027 = vshrl.u32 %v1026, 7
        %v1028 = vsub.s32 %v1025, %v1027
        %v1029 = vrot.slane %v1015, %v1028
        %v1030 = vcombine.low %v649, %v769
        %v1031 = vcombine.high %v649, %v769
        %v1033 = vunpack.c.l.s4 1983009808
        %v1034 = vunpack.c.0.s8 %v1033
        %v1035 = vlaneseq
        %v1036 = vshrl.u32 %v1035, 7
        %v1037 = vsub.s32 %v1034, %v1036
        %v1038 = vrot.slane %v1030, %v1037
        %v1040 = vunpack.c.l.s4 1983009808
        %v1041 = vunpack.c.0.s8 %v1040
        %v1042 = vlaneseq
        %v1043 = vshrl.u32 %v1042, 7
        %v1044 = vsub.s32 %v1041, %v1043
        %v1045 = vrot.slane %v1031, %v1044
        %v1046 = vcombine.low %v829, %v949
        %v1047 = vcombine.high %v829, %v949
        %v1049 = vunpack.c.l.s4 1983009808
        %v1050 = vunpack.c.0.s8 %v1049
        %v1051 = vlaneseq
        %v1052 = vshrl.u32 %v1051, 7
        %v1053 = vsub.s32 %v1050, %v1052
        %v1054 = vrot.slane %v1046, %v1053
        %v1056 = vunpack.c.l.s4 1983009808
        %v1057 = vunpack.c.0.s8 %v1056
        %v1058 = vlaneseq
        %v1059 = vshrl.u32 %v1058, 7
        %v1060 = vsub.s32 %v1057, %v1059
        %v1061 = vrot.slane %v1047, %v1060
        %v1062 = vcombine.low %v889, %v1009
        %v1063 = vcombine.high %v889, %v1009
        %v1065 = vunpack.c.l.s4 1983009808
        %v1066 = vunpack.c.0.s8 %v1065
        %v1067 = vlaneseq
        %v1068 = vshrl.u32 %v1067, 7
        %v1069 = vsub.s32 %v1066, %v1068
        %v1070 = vrot.slane %v1062, %v1069
        %v1072 = vunpack.c.l.s4 1983009808
        %v1073 = vunpack.c.0.s8 %v1072
        %v1074 = vlaneseq
        %v1075 = vshrl.u32 %v1074, 7
        %v1076 = vsub.s32 %v1073, %v1075
        %v1077 = vrot.slane %v1063, %v1076
        %v1078 = vcombine.low %v1022, %v1038
        %v1079 = vcombine.high %v1022, %v1038
        %v1081 = vunpack.c.l.s4 1934713408
        %v1082 = vunpack.c.0.s8 %v1081
        %v1083 = vlaneseq
        %v1084 = vshrl.u32 %v1083, 7
        %v1085 = vsub.s32 %v1082, %v1084
        %v1086 = vrot.slane %v1078, %v1085
        %v1088 = vunpack.c.l.s4 1934713408
        %v1089 = vunpack.c.0.s8 %v1088
        %v1090 = vlaneseq
        %v1091 = vshrl.u32 %v1090, 7
        %v1092 = vsub.s32 %v1089, %v1091
        %v1093 = vrot.slane %v1079, %v1092
        %v1094 = vcombine.low %v1029, %v1045
        %v1095 = vcombine.high %v1029, %v1045
        %v1097 = vunpack.c.l.s4 1934713408
        %v1098 = vunpack.c.0.s8 %v1097
        %v1099 = vlaneseq
        %v1100 = vshrl.u32 %v1099, 7
        %v1101 = vsub.s32 %v1098, %v1100
        %v1102 = vrot.slane %v1094, %v1101
        %v1104 = vunpack.c.l.s4 1934713408
        %v1105 = vunpack.c.0.s8 %v1104
        %v1106 = vlaneseq
        %v1107 = vshrl.u32 %v1106, 7
        %v1108 = vsub.s32 %v1105, %v1107
        %v1109 = vrot.slane %v1095, %v1108
        %v1110 = vcombine.low %v1054, %v1070
        %v1111 = vcombine.high %v1054, %v1070
        %v1113 = vunpack.c.l.s4 1934713408
        %v1114 = vunpack.c.0.s8 %v1113
        %v1115 = vlaneseq
        %v1116 = vshrl.u32 %v1115, 7
        %v1117 = vsub.s32 %v1114, %v1116
        %v1118 = vrot.slane %v1110, %v1117
        %v1120 = vunpack.c.l.s4 1934713408
        %v1121 = vunpack.c.0.s8 %v1120
        %v1122 = vlaneseq
        %v1123 = vshrl.u32 %v1122, 7
        %v1124 = vsub.s32 %v1121, %v1123
        %v1125 = vrot.slane %v1111, %v1124
        %v1126 = vcombine.low %v1061, %v1077
        %v1127 = vcombine.high %v1061, %v1077
        %v1129 = vunpack.c.l.s4 1934713408
        %v1130 = vunpack.c.0.s8 %v1129
        %v1131 = vlaneseq
        %v1132 = vshrl.u32 %v1131, 7
        %v1133 = vsub.s32 %v1130, %v1132
        %v1134 = vrot.slane %v1126, %v1133
        %v1136 = vunpack.c.l.s4 1934713408
        %v1137 = vunpack.c.0.s8 %v1136
        %v1138 = vlaneseq
        %v1139 = vshrl.u32 %v1138, 7
        %v1140 = vsub.s32 %v1137, %v1139
        %v1141 = vrot.slane %v1127, %v1140
        %v1142 = vcombine.low %v1086, %v1118
        %v1143 = vcombine.high %v1086, %v1118
        %v1144 = vcombine.low %v1093, %v1125
        %v1145 = vcombine.high %v1093, %v1125
        %v1146 = vcombine.low %v1102, %v1134
        %v1147 = vcombine.high %v1102, %v1134
        %v1148 = vcombine.low %v1109, %v1141
        %v1149 = vcombine.high %v1109, %v1141
        %1151 = vrot.lane.b32.xlu0 %v1143, 8
        %v1152 = vpop.permute.xlu0 %1151
        %1155 = vrot.lane.b32.xlu0 %v1144, 16
        %v1156 = vpop.permute.xlu0 %1155
        %1159 = vrot.lane.b32.xlu0 %v1145, 24
        %v1160 = vpop.permute.xlu0 %1159
        %1163 = vrot.lane.b32.xlu0 %v1146, 32
        %v1164 = vpop.permute.xlu0 %1163
        %1167 = vrot.lane.b32.xlu0 %v1147, 40
        %v1168 = vpop.permute.xlu0 %1167
        %1171 = vrot.lane.b32.xlu0 %v1148, 48
        %v1172 = vpop.permute.xlu0 %1171
        %1175 = vrot.lane.b32.xlu0 %v1149, 56
        %v1176 = vpop.permute.xlu0 %1175
        %vm1178 = vcmask 64512
        %v1179 = vsel %vm1178, %v1142, %v1152
        %vm1180 = vcmask 130048
        %v1181 = vsel %vm1180, %v1179, %v1156
        %vm1182 = vcmask 195584
        %v1183 = vsel %vm1182, %v1181, %v1160
        %v1184 = vsel %vm348, %v1183, %v1164
        %vm1185 = vcmask 326656
        %v1186 = vsel %vm1185, %v1184, %v1168
        %vm1187 = vcmask 392192
        %v1188 = vsel %vm1187, %v1186, %v1172
        %vm1189 = vcmask 457728
        %v1190 = vsel %vm1189, %v1188, %v1176
        %v1191 = vpack.c.bf16 %v1190, %v1190
        %v1192 = vld [vmem:[%s4] sm:$0xff]
        %v1193 = vld [vmem:[%s4 + $0x8] sm:$0xff]
        %v1194 = vld [vmem:[%s4 + $0x10] sm:$0xff]
        %v1195 = vld [vmem:[%s4 + $0x18] sm:$0xff]
        %v1196 = vld [vmem:[%s4 + $0x20] sm:$0xff]
        %v1197 = vld [vmem:[%s4 + $0x28] sm:$0xff]
        %v1198 = vld [vmem:[%s4 + $0x30] sm:$0xff]
        %v1199 = vld [vmem:[%s4 + $0x38] sm:$0xff]
        %v1200 = vld [vmem:[%s4 + $0x40] sm:$0xff]
        %v1201 = vld [vmem:[%s4 + $0x48] sm:$0xff]
        %v1202 = vld [vmem:[%s4 + $0x50] sm:$0xff]
        %v1203 = vld [vmem:[%s4 + $0x58] sm:$0xff]
        %v1204 = vld [vmem:[%s4 + $0x60] sm:$0xff]
        %v1205 = vld [vmem:[%s4 + $0x68] sm:$0xff]
        %v1206 = vld [vmem:[%s4 + $0x70] sm:$0xff]
        %v1207 = vld [vmem:[%s4 + $0x78] sm:$0xff]
        %v1208 = vpack.c.bf16 %v530, %v530
        %v1209 = vld [vmem:[%s3] sm:$0xff]
        %v1210 = vld [vmem:[%s3 + $0x8] sm:$0xff]
        %v1211 = vld [vmem:[%s3 + $0x10] sm:$0xff]
        %v1212 = vld [vmem:[%s3 + $0x18] sm:$0xff]
        %v1213 = vld [vmem:[%s3 + $0x20] sm:$0xff]
        %v1214 = vld [vmem:[%s3 + $0x28] sm:$0xff]
        %v1215 = vld [vmem:[%s3 + $0x30] sm:$0xff]
        %v1216 = vld [vmem:[%s3 + $0x38] sm:$0xff]
        %v1217 = vld [vmem:[%s3 + $0x40] sm:$0xff]
        %v1218 = vld [vmem:[%s3 + $0x48] sm:$0xff]
        %v1219 = vld [vmem:[%s3 + $0x50] sm:$0xff]
        %v1220 = vld [vmem:[%s3 + $0x58] sm:$0xff]
        %v1221 = vld [vmem:[%s3 + $0x60] sm:$0xff]
        %v1222 = vld [vmem:[%s3 + $0x68] sm:$0xff]
        %v1223 = vld [vmem:[%s3 + $0x70] sm:$0xff]
        %v1224 = vld [vmem:[%s3 + $0x78] sm:$0xff]
        %v1241 = vunpack.c.l.b16 %v1209
        %v1242 = vunpack.c.h.b16 %v1209
        %v1243 = vunpack.c.l.b16 %v1210
        %v1244 = vunpack.c.h.b16 %v1210
        %v1245 = vunpack.c.l.b16 %v1211
        %v1246 = vunpack.c.h.b16 %v1211
        %v1247 = vunpack.c.l.b16 %v1212
        %v1248 = vunpack.c.h.b16 %v1212
        %v1249 = vunpack.c.l.b16 %v1213
        %v1250 = vunpack.c.h.b16 %v1213
        %v1251 = vunpack.c.l.b16 %v1214
        %v1252 = vunpack.c.h.b16 %v1214
        %v1253 = vunpack.c.l.b16 %v1215
        %v1254 = vunpack.c.h.b16 %v1215
        %v1255 = vunpack.c.l.b16 %v1216
        %v1256 = vunpack.c.h.b16 %v1216
        %v1257 = vunpack.c.l.b16 %v1217
        %v1258 = vunpack.c.h.b16 %v1217
        %v1259 = vunpack.c.l.b16 %v1218
        %v1260 = vunpack.c.h.b16 %v1218
        %v1261 = vunpack.c.l.b16 %v1219
        %v1262 = vunpack.c.h.b16 %v1219
        %v1263 = vunpack.c.l.b16 %v1220
        %v1264 = vunpack.c.h.b16 %v1220
        %v1265 = vunpack.c.l.b16 %v1221
        %v1266 = vunpack.c.h.b16 %v1221
        %v1267 = vunpack.c.l.b16 %v1222
        %v1268 = vunpack.c.h.b16 %v1222
        %v1269 = vunpack.c.l.b16 %v1223
        %v1270 = vunpack.c.h.b16 %v1223
        %v1271 = vunpack.c.l.b16 %v1224
        %v1272 = vunpack.c.h.b16 %v1224
        %v1273 = vpack.c.b16 %v1245, %v1241
        %v1274 = vpack.c.b16 %v1246, %v1242
        %v1275 = vpack.c.b16 %v1247, %v1243
        %v1276 = vpack.c.b16 %v1248, %v1244
        %v1277 = vpack.c.b16 %v1253, %v1249
        %v1278 = vpack.c.b16 %v1254, %v1250
        %v1279 = vpack.c.b16 %v1255, %v1251
        %v1280 = vpack.c.b16 %v1256, %v1252
        %v1281 = vpack.c.b16 %v1261, %v1257
        %v1282 = vpack.c.b16 %v1262, %v1258
        %v1283 = vpack.c.b16 %v1263, %v1259
        %v1284 = vpack.c.b16 %v1264, %v1260
        %v1285 = vpack.c.b16 %v1269, %v1265
        %v1286 = vpack.c.b16 %v1270, %v1266
        %v1287 = vpack.c.b16 %v1271, %v1267
        %v1288 = vpack.c.b16 %v1272, %v1268
        %v1306 = vsel %vm352, %v1208, 0
        %1308 = vmatprep.subr.bf16.mxu0 %v1274
        %1309 = vmatpush1.bf16.msra.mxu0 %v1273
        %1310 = vmatprep.subr.bf16.mxu0 %v1278
        %1311 = vmatpush1.bf16.msra.mxu0 %v1277
        %1312 = vmatprep.subr.bf16.mxu0 %v1282
        %1313 = vmatpush1.bf16.msra.mxu0 %v1281
        %1314 = vmatprep.subr.bf16.mxu0 %v1286
        %1315 = vmatpush1.bf16.msra.mxu0 %v1285
        %1316 = vmatprep.subr.bf16.mxu0 0
        %1317 = vmatpush1.bf16.msra.mxu0 0
        %1318 = vmatprep.subr.bf16.mxu0 0
        %1319 = vmatpush1.bf16.msra.mxu0 0
        %1320 = vmatprep.subr.bf16.mxu0 0
        %1321 = vmatpush1.bf16.msra.mxu0 0
        %1322 = vmatprep.subr.bf16.mxu0 0
        %1323 = vmatpush1.bf16.msra.mxu0 0
        %1324 = vmatprep.subr.bf16.mxu0 0
        %1325 = vmatpush1.bf16.msra.mxu0 0
        %1326 = vmatprep.subr.bf16.mxu0 0
        %1327 = vmatpush1.bf16.msra.mxu0 0
        %1328 = vmatprep.subr.bf16.mxu0 0
        %1329 = vmatpush1.bf16.msra.mxu0 0
        %1330 = vmatprep.subr.bf16.mxu0 0
        %1331 = vmatpush1.bf16.msra.mxu0 0
        %1332 = vmatprep.subr.bf16.mxu0 0
        %1333 = vmatpush1.bf16.msra.mxu0 0
        %1334 = vmatprep.subr.bf16.mxu0 0
        %1335 = vmatpush1.bf16.msra.mxu0 0
        %1336 = vmatprep.subr.bf16.mxu0 0
        %1337 = vmatpush1.bf16.msra.mxu0 0
        %1338 = vmatprep.subr.bf16.mxu0 0
        %1339 = vmatpush1.bf16.msra.mxu0 0
        %1340 = vmatprep.mubr.bf16.mxu0 0
        %1341 = vmatmul.mubr.bf16.gmra.mrb[0].mxu0 %v1306
        %v1342 = vpop.f32.mrb[0].mxu0
        %v1343 = vadd.f32 0.0, %v1342
        %v1344 = vpop.f32.mrb[0].mxu0
        %v1345 = vadd.f32 0.0, %v1344
        %v1346 = vpop.f32.mrb[0].mxu0
        %v1347 = vpop.f32.mrb[0].mxu0
        %1348 = vdwg.mxu0
        %1349 = vmatprep.subr.bf16.mxu0 %v1276
        %1350 = vmatpush1.bf16.msra.mxu0 %v1275
        %1351 = vmatprep.subr.bf16.mxu0 %v1280
        %1352 = vmatpush1.bf16.msra.mxu0 %v1279
        %1353 = vmatprep.subr.bf16.mxu0 %v1284
        %1354 = vmatpush1.bf16.msra.mxu0 %v1283
        %1355 = vmatprep.subr.bf16.mxu0 %v1288
        %1356 = vmatpush1.bf16.msra.mxu0 %v1287
        %1357 = vmatprep.subr.bf16.mxu0 0
        %1358 = vmatpush1.bf16.msra.mxu0 0
        %1359 = vmatprep.subr.bf16.mxu0 0
        %1360 = vmatpush1.bf16.msra.mxu0 0
        %1361 = vmatprep.subr.bf16.mxu0 0
        %1362 = vmatpush1.bf16.msra.mxu0 0
        %1363 = vmatprep.subr.bf16.mxu0 0
        %1364 = vmatpush1.bf16.msra.mxu0 0
        %1365 = vmatprep.subr.bf16.mxu0 0
        %1366 = vmatpush1.bf16.msra.mxu0 0
        %1367 = vmatprep.subr.bf16.mxu0 0
        %1368 = vmatpush1.bf16.msra.mxu0 0
        %1369 = vmatprep.subr.bf16.mxu0 0
        %1370 = vmatpush1.bf16.msra.mxu0 0
        %1371 = vmatprep.subr.bf16.mxu0 0
        %1372 = vmatpush1.bf16.msra.mxu0 0
        %1373 = vmatprep.subr.bf16.mxu0 0
        %1374 = vmatpush1.bf16.msra.mxu0 0
        %1375 = vmatprep.subr.bf16.mxu0 0
        %1376 = vmatpush1.bf16.msra.mxu0 0
        %1377 = vmatprep.subr.bf16.mxu0 0
        %1378 = vmatpush1.bf16.msra.mxu0 0
        %1379 = vmatprep.subr.bf16.mxu0 0
        %1380 = vmatpush1.bf16.msra.mxu0 0
        %1381 = vmatprep.mubr.bf16.mxu0 0
        %1382 = vmatmul.mubr.bf16.gmra.mrb[0].mxu0 %v1306
        %v1383 = vpop.f32.mrb[0].mxu0
        %v1384 = vadd.f32 0.0, %v1383
        %v1385 = vpop.f32.mrb[0].mxu0
        %v1386 = vadd.f32 0.0, %v1385
        %v1387 = vpop.f32.mrb[0].mxu0
        %v1388 = vpop.f32.mrb[0].mxu0
        %1389 = vdwg.mxu0
        %v1406 = vunpack.c.l.b16 %v1192
        %v1407 = vunpack.c.h.b16 %v1192
        %v1408 = vunpack.c.l.b16 %v1193
        %v1409 = vunpack.c.h.b16 %v1193
        %v1410 = vunpack.c.l.b16 %v1194
        %v1411 = vunpack.c.h.b16 %v1194
        %v1412 = vunpack.c.l.b16 %v1195
        %v1413 = vunpack.c.h.b16 %v1195
        %v1414 = vunpack.c.l.b16 %v1196
        %v1415 = vunpack.c.h.b16 %v1196
        %v1416 = vunpack.c.l.b16 %v1197
        %v1417 = vunpack.c.h.b16 %v1197
        %v1418 = vunpack.c.l.b16 %v1198
        %v1419 = vunpack.c.h.b16 %v1198
        %v1420 = vunpack.c.l.b16 %v1199
        %v1421 = vunpack.c.h.b16 %v1199
        %v1422 = vunpack.c.l.b16 %v1200
        %v1423 = vunpack.c.h.b16 %v1200
        %v1424 = vunpack.c.l.b16 %v1201
        %v1425 = vunpack.c.h.b16 %v1201
        %v1426 = vunpack.c.l.b16 %v1202
        %v1427 = vunpack.c.h.b16 %v1202
        %v1428 = vunpack.c.l.b16 %v1203
        %v1429 = vunpack.c.h.b16 %v1203
        %v1430 = vunpack.c.l.b16 %v1204
        %v1431 = vunpack.c.h.b16 %v1204
        %v1432 = vunpack.c.l.b16 %v1205
        %v1433 = vunpack.c.h.b16 %v1205
        %v1434 = vunpack.c.l.b16 %v1206
        %v1435 = vunpack.c.h.b16 %v1206
        %v1436 = vunpack.c.l.b16 %v1207
        %v1437 = vunpack.c.h.b16 %v1207
        %v1438 = vpack.c.b16 %v1410, %v1406
        %v1439 = vpack.c.b16 %v1411, %v1407
        %v1440 = vpack.c.b16 %v1412, %v1408
        %v1441 = vpack.c.b16 %v1413, %v1409
        %v1442 = vpack.c.b16 %v1418, %v1414
        %v1443 = vpack.c.b16 %v1419, %v1415
        %v1444 = vpack.c.b16 %v1420, %v1416
        %v1445 = vpack.c.b16 %v1421, %v1417
        %v1446 = vpack.c.b16 %v1426, %v1422
        %v1447 = vpack.c.b16 %v1427, %v1423
        %v1448 = vpack.c.b16 %v1428, %v1424
        %v1449 = vpack.c.b16 %v1429, %v1425
        %v1450 = vpack.c.b16 %v1434, %v1430
        %v1451 = vpack.c.b16 %v1435, %v1431
        %v1452 = vpack.c.b16 %v1436, %v1432
        %v1453 = vpack.c.b16 %v1437, %v1433
        %v1471 = vsel %vm352, %v1191, 0
        %1473 = vmatprep.subr.bf16.mxu0 %v1439
        %1474 = vmatpush1.bf16.msra.mxu0 %v1438
        %1475 = vmatprep.subr.bf16.mxu0 %v1443
        %1476 = vmatpush1.bf16.msra.mxu0 %v1442
        %1477 = vmatprep.subr.bf16.mxu0 %v1447
        %1478 = vmatpush1.bf16.msra.mxu0 %v1446
        %1479 = vmatprep.subr.bf16.mxu0 %v1451
        %1480 = vmatpush1.bf16.msra.mxu0 %v1450
        %1481 = vmatprep.subr.bf16.mxu0 0
        %1482 = vmatpush1.bf16.msra.mxu0 0
        %1483 = vmatprep.subr.bf16.mxu0 0
        %1484 = vmatpush1.bf16.msra.mxu0 0
        %1485 = vmatprep.subr.bf16.mxu0 0
        %1486 = vmatpush1.bf16.msra.mxu0 0
        %1487 = vmatprep.subr.bf16.mxu0 0
        %1488 = vmatpush1.bf16.msra.mxu0 0
        %1489 = vmatprep.subr.bf16.mxu0 0
        %1490 = vmatpush1.bf16.msra.mxu0 0
        %1491 = vmatprep.subr.bf16.mxu0 0
        %1492 = vmatpush1.bf16.msra.mxu0 0
        %1493 = vmatprep.subr.bf16.mxu0 0
        %1494 = vmatpush1.bf16.msra.mxu0 0
        %1495 = vmatprep.subr.bf16.mxu0 0
        %1496 = vmatpush1.bf16.msra.mxu0 0
        %1497 = vmatprep.subr.bf16.mxu0 0
        %1498 = vmatpush1.bf16.msra.mxu0 0
        %1499 = vmatprep.subr.bf16.mxu0 0
        %1500 = vmatpush1.bf16.msra.mxu0 0
        %1501 = vmatprep.subr.bf16.mxu0 0
        %1502 = vmatpush1.bf16.msra.mxu0 0
        %1503 = vmatprep.subr.bf16.mxu0 0
        %1504 = vmatpush1.bf16.msra.mxu0 0
        %1505 = vmatprep.mubr.bf16.mxu0 0
        %1506 = vmatmul.mubr.bf16.gmra.mrb[0].mxu0 %v1471
        %v1507 = vpop.f32.mrb[0].mxu0
        %v1508 = vadd.f32 %v1343, %v1507
        %v1509 = vpop.f32.mrb[0].mxu0
        %v1510 = vadd.f32 %v1345, %v1509
        %v1511 = vpop.f32.mrb[0].mxu0
        %v1512 = vpop.f32.mrb[0].mxu0
        %1513 = vdwg.mxu0
        %1514 = vmatprep.subr.bf16.mxu0 %v1441
        %1515 = vmatpush1.bf16.msra.mxu0 %v1440
        %1516 = vmatprep.subr.bf16.mxu0 %v1445
        %1517 = vmatpush1.bf16.msra.mxu0 %v1444
        %1518 = vmatprep.subr.bf16.mxu0 %v1449
        %1519 = vmatpush1.bf16.msra.mxu0 %v1448
        %1520 = vmatprep.subr.bf16.mxu0 %v1453
        %1521 = vmatpush1.bf16.msra.mxu0 %v1452
        %1522 = vmatprep.subr.bf16.mxu0 0
        %1523 = vmatpush1.bf16.msra.mxu0 0
        %1524 = vmatprep.subr.bf16.mxu0 0
        %1525 = vmatpush1.bf16.msra.mxu0 0
        %1526 = vmatprep.subr.bf16.mxu0 0
        %1527 = vmatpush1.bf16.msra.mxu0 0
        %1528 = vmatprep.subr.bf16.mxu0 0
        %1529 = vmatpush1.bf16.msra.mxu0 0
        %1530 = vmatprep.subr.bf16.mxu0 0
        %1531 = vmatpush1.bf16.msra.mxu0 0
        %1532 = vmatprep.subr.bf16.mxu0 0
        %1533 = vmatpush1.bf16.msra.mxu0 0
        %1534 = vmatprep.subr.bf16.mxu0 0
        %1535 = vmatpush1.bf16.msra.mxu0 0
        %1536 = vmatprep.subr.bf16.mxu0 0
        %1537 = vmatpush1.bf16.msra.mxu0 0
        %1538 = vmatprep.subr.bf16.mxu0 0
        %1539 = vmatpush1.bf16.msra.mxu0 0
        %1540 = vmatprep.subr.bf16.mxu0 0
        %1541 = vmatpush1.bf16.msra.mxu0 0
        %1542 = vmatprep.subr.bf16.mxu0 0
        %1543 = vmatpush1.bf16.msra.mxu0 0
        %1544 = vmatprep.subr.bf16.mxu0 0
        %1545 = vmatpush1.bf16.msra.mxu0 0
        %1546 = vmatprep.mubr.bf16.mxu0 0
        %1547 = vmatmul.mubr.bf16.gmra.mrb[0].mxu0 %v1471
        %v1548 = vpop.f32.mrb[0].mxu0
        %v1549 = vadd.f32 %v1384, %v1548
        %v1550 = vpop.f32.mrb[0].mxu0
        %v1551 = vadd.f32 %v1386, %v1550
        %v1552 = vpop.f32.mrb[0].mxu0
        %v1553 = vpop.f32.mrb[0].mxu0
        %1554 = vdwg.mxu0
        %v1555 = vpack.c.bf16 %v1508, %v1508
        %v1556 = vpack.c.bf16 %v1510, %v1510
        %v1557 = vpack.c.bf16 %v1549, %v1549
        %v1558 = vpack.c.bf16 %v1551, %v1551
        %v1563 = vunpack.c.l.b16 %v1555
        %v1564 = vunpack.c.l.b16 %v1556
        %v1565 = vunpack.c.l.b16 %v1557
        %v1566 = vunpack.c.l.b16 %v1558
        %v1567 = vpack.c.b16 %v1564, %v1563
        %v1568 = vpack.c.b16 %v1566, %v1565
        %1571 = vst [vmem:[%s217] sm:$0xff] %v1567
        %1572 = vst [vmem:[%s217 + $0x8] sm:$0xff] %v1568
        %s1573 = sand.u32 %s137, 1
        %s1574 = scalar_lea.sflag [#allocation3], %s1573
        %s1575 = sand.u32 %s137, 1
        %s1576 = smul.addr %s1575, 16
        %s1577 = scalar_lea.vmem [#allocation2], %s1576
        // Predicated region
        $region41: #{tpu_custom_call.1} parent=39 // pred_check
          %p1578 = pneg %p147
        $region42: #{tpu_custom_call.1} parent=39 // pred_check_branch
          %1580 = sbr.rel (%p1578) target = $region44
        $region43: #{tpu_custom_call.1} parent=39 // pred_region
          %s1582 = ssub.s32 256, 256
          %1583 = vsyncadd %s1574, %s1582
          %s1584 = smul.addr %s19, 4
          %s1585 = smul.addr %s1584, 64
          %s1586 = scalar_lea.hbm %s5, %s1585
          %s1588 = sshll.u32 %s1577, 4
          %s1589 = int_to_ptr.vmem [resolvable:$true] %s1588
          %1591 = dma.vmem_to_hbm [thread:$0]  %s1589, 256, %s1586, %s1574
        $region44: #{tpu_custom_call.1} parent=39 // pred_fallthru
          _
      $region40: #{tpu_custom_call.1} parent=5 // pred_fallthru
        _
      %p1592 = scmp.le.s32.totalorder 2, %s14
      // Predicated region
      $region45: #{tpu_custom_call.1} parent=5 // pred_check
        %p1593 = pneg %p1592
      $region46: #{tpu_custom_call.1} parent=5 // pred_check_branch
        %1595 = sbr.rel (%p1593) target = $region48
      $region47: #{tpu_custom_call.1} parent=5 // pred_region
        %s1596 = ssub.s32 %s14, 2
        // Predicated region
        $region49: #{tpu_custom_call.1} parent=47 // pred_check
          %p1597 = pneg %p153
        $region50: #{tpu_custom_call.1} parent=47 // pred_check_branch
          %1599 = sbr.rel (%p1597) target = $region52
        $region51: #{tpu_custom_call.1} parent=47 // pred_region
          %s1600 = sand.u32 %s138, 1
          %s1601 = scalar_lea.sflag [#allocation3], %s1600
          %s1602 = sand.u32 %s138, 1
          %s1603 = smul.addr %s1602, 16
          %s1604 = scalar_lea.vmem [#allocation2], %s1603
          %1605 = dma.done %s1601, 256
        $region52: #{tpu_custom_call.1} parent=47 // pred_fallthru
          _
      $region48: #{tpu_custom_call.1} parent=5 // pred_fallthru
        _
    $region6: #{tpu_custom_call.1} parent=1 // loop_footer
      %s18 = sadd.s32 1, %s14
    $region7: #{tpu_custom_call.1} parent=1 // loop_footer_branch
      %13 = sbr.rel target = $region3
    $region8: #{tpu_custom_call.1} parent=1 // loop_exit
      _
    %1606 = vsyncpa [#allocation3], 1
    %s1607 = scalar_lea.sflag [#allocation3], 1
    %1608 = vsyncpa %s1607, 1

</llo_original>
